<compile_context>
chip_gen: v5e
topology: v5e:2x2
jax: 0.10.0
libtpu: 0.0.40
codegen_flags: <defaults>
</compile_context>

<pallas_src>
import math
import jax
import jax.numpy as jnp
from jax import lax
from jax.experimental import pallas as pl
from jax.experimental.pallas import tpu as pltpu

NTOKEN = 631   # fixed: TransformerModel(631, n_words, 2, 120, 2)
NHEAD = 2
NHID = 120
NLAYERS = 2
PE_MAX_LEN = 64   # (torch uses 5000; only the first S rows are ever used)


def make_kernel(S, Tp, D, H):
    HD = D // H
    bf16 = jnp.bfloat16

    def layer_norm(x, w, b, eps=1e-5):
        mu = jnp.mean(x, axis=-1, keepdims=True)
        xc = x - mu
        var = jnp.mean(xc * xc, axis=-1, keepdims=True)
        return xc * lax.rsqrt(var + eps) * w + b

    def encoder_layer(x2d, p):
        (wqkv, bqkv, wo, bo, ln1w, ln1b, w1, b1, w2, b2, ln2w, ln2b) = p
        # fused in-projection (Wq|Wk|Wv); 1/sqrt(HD) pre-folded into Wq/bq
        qkv = jnp.dot(x2d.astype(bf16), wqkv,
                      preferred_element_type=jnp.float32) + bqkv
        # stack heads along a new LEADING axis (cheap; no lane-dim reshuffle)
        qh = jnp.stack([qkv[:, h * HD:(h + 1) * HD] for h in range(H)], axis=0)
        kh = jnp.stack([qkv[:, D + h * HD:D + (h + 1) * HD]
                        for h in range(H)], axis=0)
        vh = jnp.stack([qkv[:, 2 * D + h * HD:2 * D + (h + 1) * HD]
                        for h in range(H)], axis=0)
        # batched attention over heads: 2 einsums per layer instead of 2*H
        s = jnp.einsum('hqd,hkd->hqk', qh.astype(bf16), kh.astype(bf16),
                       preferred_element_type=jnp.float32)
        m = jnp.max(s, axis=-1, keepdims=True)
        e = jnp.exp(s - m)
        pattn = e * pl.reciprocal(jnp.sum(e, axis=-1, keepdims=True),
                                  approx=True)
        ctx = jnp.einsum('hqk,hkd->hqd', pattn.astype(bf16), vh.astype(bf16),
                         preferred_element_type=jnp.float32)
        attn = jnp.concatenate([ctx[h] for h in range(H)], axis=-1)
        attn = jnp.dot(attn.astype(bf16), wo,
                       preferred_element_type=jnp.float32) + bo
        # post-norm encoder layer (norm_first=False); dropout = identity (eval)
        y = layer_norm(x2d + attn, ln1w, ln1b)
        hdn = jnp.maximum(
            jnp.dot(y.astype(bf16), w1, preferred_element_type=jnp.float32)
            + b1, 0.0)
        z = jnp.dot(hdn.astype(bf16), w2,
                    preferred_element_type=jnp.float32) + b2
        return layer_norm(y + z, ln2w, ln2b)

    def kernel(*refs):
        (x_ref, enc_w, enc_b, pe,
         *layer_refs, dec_w, dec_b, gum_ref, out_ref) = refs

        x = x_ref[0]                              # (S, Tp) -- one batch element
        # token encoder Linear(631->D); sqrt(D) scale pre-folded into enc_w/b
        x = jnp.dot(x.astype(bf16), enc_w[...],
                    preferred_element_type=jnp.float32) + enc_b[...]
        x = x + pe[...]                           # positional enc; dropout=id

        for li in range(NLAYERS):
            p = tuple(r[...] for r in layer_refs[li * 12:(li + 1) * 12])
            x = encoder_layer(x, p)

        # decoder Linear(D -> Tp); padded lanes carry dec_b = -1e30
        logits = jnp.dot(x.astype(bf16), dec_w[...],
                         preferred_element_type=jnp.float32) + dec_b[...]
        # log_softmax dropped: argmax((log_softmax(l)+g)/tau) == argmax(l+g)
        y = logits + gum_ref[0]
        ymax = jnp.max(y, axis=-1, keepdims=True)
        iota = lax.broadcasted_iota(jnp.int32, (S, Tp), 1)
        cand = jnp.where(y == ymax, iota, Tp)
        idx = jnp.min(cand, axis=-1, keepdims=True)   # first-argmax tie-break
        out_ref[...] = (iota == idx).astype(jnp.float32).reshape(1, S, Tp)

    return kernel


def init_params(key, T, D, H, F):
    keys = iter(jax.random.split(key, 64))

    def u(shape, a=0.1):
        return jax.random.uniform(next(keys), shape, jnp.float32, -a, a)

    params = [u((T, D)), u((1, D))]               # encoder Linear(631 -> D)

    # sinusoidal positional-encoding table
    pos = jnp.arange(PE_MAX_LEN, dtype=jnp.float32)[:, None]
    div = jnp.exp(jnp.arange(0, D, 2, dtype=jnp.float32)
                  * (-math.log(10000.0) / D))
    pe = jnp.zeros((PE_MAX_LEN, D), jnp.float32)
    pe = pe.at[:, 0::2].set(jnp.sin(pos * div))
    pe = pe.at[:, 1::2].set(jnp.cos(pos * div))
    params.append(pe)

    for _ in range(NLAYERS):
        params += [
            u((D, 3 * D)), u((1, 3 * D)),                        # in-proj qkv
            u((D, D)), u((1, D)),                                # out-proj
            jnp.ones((1, D), jnp.float32), jnp.zeros((1, D), jnp.float32),  # ln1
            u((D, F)), u((1, F)),                                # ffn linear1
            u((F, D)), u((1, D)),                                # ffn linear2
            jnp.ones((1, D), jnp.float32), jnp.zeros((1, D), jnp.float32),  # ln2
        ]

    params += [u((D, T)), jnp.zeros((1, T), jnp.float32)]        # decoder
    return params


def generator_t_forward(params, x_sbt, gumbel_sbt, temp=0.1):
    S, B, T = x_sbt.shape
    D = params[0].shape[1]
    Tp = ((T + 127) // 128) * 128          # 631 -> 640 (lane-dense vocab)
    Fp = ((NHID + 127) // 128) * 128       # 120 -> 128 (lane-dense FFN hidden)
    emb_scale = math.sqrt(D)
    q_scale = 1.0 / math.sqrt(D // NHEAD)
    bf16 = jnp.bfloat16

    # activations: batch-major, vocab zero-padded to Tp
    x_bst = jnp.transpose(x_sbt, (1, 0, 2)).astype(jnp.float32)
    g_bst = jnp.transpose(gumbel_sbt, (1, 0, 2)).astype(jnp.float32)
    x_bst = jnp.pad(x_bst, ((0, 0), (0, 0), (0, Tp - T)))
    g_bst = jnp.pad(g_bst, ((0, 0), (0, 0), (0, Tp - T)))

    # encoder: fold sqrt(D) scale, zero-pad vocab rows, cast weight to bf16
    enc_w = jnp.pad(params[0] * emb_scale, ((0, Tp - T), (0, 0))).astype(bf16)
    enc_b = params[1] * emb_scale
    pe = params[2][:S]

    layer_params = []
    for li in range(NLAYERS):
        (wqkv, bqkv, wo, bo, ln1w, ln1b, w1, b1, w2, b2, ln2w, ln2b) = \
            params[3 + li * 12: 3 + (li + 1) * 12]
        # fold 1/sqrt(head_dim) into the Wq block of the fused in-projection
        scale = jnp.concatenate([jnp.full((1, D), q_scale, jnp.float32),
                                 jnp.ones((1, 2 * D), jnp.float32)], axis=-1)
        wqkv = (wqkv * scale).astype(bf16)
        bqkv = bqkv * scale
        # pad FFN hidden 120 -> 128 with zeros (ReLU(0)=0 contributes nothing)
        w1 = jnp.pad(w1, ((0, 0), (0, Fp - NHID))).astype(bf16)
        b1 = jnp.pad(b1, ((0, 0), (0, Fp - NHID)))
        w2 = jnp.pad(w2, ((0, Fp - NHID), (0, 0))).astype(bf16)
        layer_params += [wqkv, bqkv, wo.astype(bf16), bo, ln1w, ln1b,
                         w1, b1, w2, b2, ln2w, ln2b]

    dec_w = jnp.pad(params[-2], ((0, 0), (0, Tp - T))).astype(bf16)
    # padded decoder-bias lanes get -1e30 so a pad lane can never win argmax
    dec_b = jnp.pad(params[-1], ((0, 0), (0, Tp - T)), constant_values=-1e30)

    inputs = [x_bst, enc_w, enc_b, pe] + layer_params + [dec_w, dec_b, g_bst]

    def act_spec():
        return pl.BlockSpec((1, S, Tp), lambda b: (b, 0, 0))

    def weight_spec(a):
        return pl.BlockSpec(a.shape, lambda b: (0, 0))   # resident across grid

    in_specs = [act_spec()] + [weight_spec(a) for a in inputs[1:-1]] + [act_spec()]

    kernel = make_kernel(S, Tp, D, NHEAD)
    out = pl.pallas_call(
        kernel,
        out_shape=jax.ShapeDtypeStruct((B, S, Tp), jnp.float32),
        grid=(B,),                                   # one batch row per program
        in_specs=in_specs,
        out_specs=act_spec(),
        compiler_params=pltpu.CompilerParams(
            dimension_semantics=("parallel",)),       # megacore split on v7x
    )(*inputs)
    # drop vocab padding, back to (S, B, T) like PyTorch
    return jnp.transpose(out[:, :, :T], (1, 0, 2))


if __name__ == "__main__":
    n_words = 32      # d_model of GeneratorT(n_words); divisible by nhead=2
    S, B = 8, 2

    key = jax.random.PRNGKey(0)
    kp, kx, kg = jax.random.split(key, 3)
    params = init_params(kp, NTOKEN, n_words, NHEAD, NHID)

    x = jax.random.normal(kx, (S, B, NTOKEN), jnp.float32)
    gumbel_noise = jax.random.gumbel(kg, (S, B, NTOKEN), jnp.float32)

    out = generator_t_forward(params, x, gumbel_noise, temp=0.1)
    out = jax.block_until_ready(out)

    assert out.shape == (S, B, NTOKEN)
    # hard gumbel-softmax forward: every (seq, batch) position is a one-hot row
    assert bool(jnp.all(jnp.sum(out, axis=-1) == 1.0))
    assert bool(jnp.all((out == 0.0) | (out == 1.0)))
    print("KERNEL_OK")
</pallas_src>

<mosaic_0001>
module attributes {stable_mosaic.version = 11 : i64} {
  func.func @kernel(%arg0: i32, %arg1: memref<1x8x640xf32, #tpu.memory_space<vmem>>, %arg2: memref<640x32xbf16, #tpu.memory_space<vmem>>, %arg3: memref<1x32xf32, #tpu.memory_space<vmem>>, %arg4: memref<8x32xf32, #tpu.memory_space<vmem>>, %arg5: memref<32x96xbf16, #tpu.memory_space<vmem>>, %arg6: memref<1x96xf32, #tpu.memory_space<vmem>>, %arg7: memref<32x32xbf16, #tpu.memory_space<vmem>>, %arg8: memref<1x32xf32, #tpu.memory_space<vmem>>, %arg9: memref<1x32xf32, #tpu.memory_space<vmem>>, %arg10: memref<1x32xf32, #tpu.memory_space<vmem>>, %arg11: memref<32x128xbf16, #tpu.memory_space<vmem>>, %arg12: memref<1x128xf32, #tpu.memory_space<vmem>>, %arg13: memref<128x32xbf16, #tpu.memory_space<vmem>>, %arg14: memref<1x32xf32, #tpu.memory_space<vmem>>, %arg15: memref<1x32xf32, #tpu.memory_space<vmem>>, %arg16: memref<1x32xf32, #tpu.memory_space<vmem>>, %arg17: memref<32x96xbf16, #tpu.memory_space<vmem>>, %arg18: memref<1x96xf32, #tpu.memory_space<vmem>>, %arg19: memref<32x32xbf16, #tpu.memory_space<vmem>>, %arg20: memref<1x32xf32, #tpu.memory_space<vmem>>, %arg21: memref<1x32xf32, #tpu.memory_space<vmem>>, %arg22: memref<1x32xf32, #tpu.memory_space<vmem>>, %arg23: memref<32x128xbf16, #tpu.memory_space<vmem>>, %arg24: memref<1x128xf32, #tpu.memory_space<vmem>>, %arg25: memref<128x32xbf16, #tpu.memory_space<vmem>>, %arg26: memref<1x32xf32, #tpu.memory_space<vmem>>, %arg27: memref<1x32xf32, #tpu.memory_space<vmem>>, %arg28: memref<1x32xf32, #tpu.memory_space<vmem>>, %arg29: memref<32x640xbf16, #tpu.memory_space<vmem>>, %arg30: memref<1x640xf32, #tpu.memory_space<vmem>>, %arg31: memref<1x8x640xf32, #tpu.memory_space<vmem>>, %arg32: memref<1x8x640xf32, #tpu.memory_space<vmem>>) attributes {dimension_semantics = [#tpu.dimension_semantics<parallel>], iteration_bounds = array<i64: 2>, scalar_prefetch = 0 : i64, scratch_operands = 0 : i64, tpu.core_type = #tpu.core_type<tc>, window_params = [{transform_indices = @transform_0, window_bounds = array<i64: 1, 8, 640>}, {pipeline_mode = #tpu.pipeline_mode<synchronous>, transform_indices = @transform_1, window_bounds = array<i64: 640, 32>}, {pipeline_mode = #tpu.pipeline_mode<synchronous>, transform_indices = @transform_2, window_bounds = array<i64: 1, 32>}, {pipeline_mode = #tpu.pipeline_mode<synchronous>, transform_indices = @transform_3, window_bounds = array<i64: 8, 32>}, {pipeline_mode = #tpu.pipeline_mode<synchronous>, transform_indices = @transform_4, window_bounds = array<i64: 32, 96>}, {pipeline_mode = #tpu.pipeline_mode<synchronous>, transform_indices = @transform_5, window_bounds = array<i64: 1, 96>}, {pipeline_mode = #tpu.pipeline_mode<synchronous>, transform_indices = @transform_6, window_bounds = array<i64: 32, 32>}, {pipeline_mode = #tpu.pipeline_mode<synchronous>, transform_indices = @transform_7, window_bounds = array<i64: 1, 32>}, {pipeline_mode = #tpu.pipeline_mode<synchronous>, transform_indices = @transform_8, window_bounds = array<i64: 1, 32>}, {pipeline_mode = #tpu.pipeline_mode<synchronous>, transform_indices = @transform_9, window_bounds = array<i64: 1, 32>}, {pipeline_mode = #tpu.pipeline_mode<synchronous>, transform_indices = @transform_10, window_bounds = array<i64: 32, 128>}, {pipeline_mode = #tpu.pipeline_mode<synchronous>, transform_indices = @transform_11, window_bounds = array<i64: 1, 128>}, {pipeline_mode = #tpu.pipeline_mode<synchronous>, transform_indices = @transform_12, window_bounds = array<i64: 128, 32>}, {pipeline_mode = #tpu.pipeline_mode<synchronous>, transform_indices = @transform_13, window_bounds = array<i64: 1, 32>}, {pipeline_mode = #tpu.pipeline_mode<synchronous>, transform_indices = @transform_14, window_bounds = array<i64: 1, 32>}, {pipeline_mode = #tpu.pipeline_mode<synchronous>, transform_indices = @transform_15, window_bounds = array<i64: 1, 32>}, {pipeline_mode = #tpu.pipeline_mode<synchronous>, transform_indices = @transform_16, window_bounds = array<i64: 32, 96>}, {pipeline_mode = #tpu.pipeline_mode<synchronous>, transform_indices = @transform_17, window_bounds = array<i64: 1, 96>}, {pipeline_mode = #tpu.pipeline_mode<synchronous>, transform_indices = @transform_18, window_bounds = array<i64: 32, 32>}, {pipeline_mode = #tpu.pipeline_mode<synchronous>, transform_indices = @transform_19, window_bounds = array<i64: 1, 32>}, {pipeline_mode = #tpu.pipeline_mode<synchronous>, transform_indices = @transform_20, window_bounds = array<i64: 1, 32>}, {pipeline_mode = #tpu.pipeline_mode<synchronous>, transform_indices = @transform_21, window_bounds = array<i64: 1, 32>}, {pipeline_mode = #tpu.pipeline_mode<synchronous>, transform_indices = @transform_22, window_bounds = array<i64: 32, 128>}, {pipeline_mode = #tpu.pipeline_mode<synchronous>, transform_indices = @transform_23, window_bounds = array<i64: 1, 128>}, {pipeline_mode = #tpu.pipeline_mode<synchronous>, transform_indices = @transform_24, window_bounds = array<i64: 128, 32>}, {pipeline_mode = #tpu.pipeline_mode<synchronous>, transform_indices = @transform_25, window_bounds = array<i64: 1, 32>}, {pipeline_mode = #tpu.pipeline_mode<synchronous>, transform_indices = @transform_26, window_bounds = array<i64: 1, 32>}, {pipeline_mode = #tpu.pipeline_mode<synchronous>, transform_indices = @transform_27, window_bounds = array<i64: 1, 32>}, {pipeline_mode = #tpu.pipeline_mode<synchronous>, transform_indices = @transform_28, window_bounds = array<i64: 32, 640>}, {pipeline_mode = #tpu.pipeline_mode<synchronous>, transform_indices = @transform_29, window_bounds = array<i64: 1, 640>}, {transform_indices = @transform_30, window_bounds = array<i64: 1, 8, 640>}, {transform_indices = @transform_31, window_bounds = array<i64: 1, 8, 640>}]} {
    %c0 = arith.constant 0 : index
    %c0_0 = arith.constant 0 : index
    %c0_1 = arith.constant 0 : index
    %0 = vector.load %arg1[%c0, %c0_0, %c0_1] : memref<1x8x640xf32, #tpu.memory_space<vmem>>, vector<1x8x640xf32>
    %1 = vector.shape_cast %0 : vector<1x8x640xf32> to vector<8x640xf32>
    %2 = arith.truncf %1 : vector<8x640xf32> to vector<8x640xbf16>
    %c0_2 = arith.constant 0 : index
    %c0_3 = arith.constant 0 : index
    %3 = vector.load %arg2[%c0_2, %c0_3] : memref<640x32xbf16, #tpu.memory_space<vmem>>, vector<640x32xbf16>
    %cst = arith.constant dense<0.000000e+00> : vector<8x32xf32>
    %4 = tpu.matmul %2, %3, %cst {dimension_numbers = #tpu.dot_dimension_numbers<[1], [0], [0], [1], [0, 0, 1, 1], [], []>} : vector<8x640xbf16>, vector<640x32xbf16>, vector<8x32xf32> -> vector<8x32xf32>
    %c0_4 = arith.constant 0 : index
    %c0_5 = arith.constant 0 : index
    %5 = vector.load %arg3[%c0_4, %c0_5] : memref<1x32xf32, #tpu.memory_space<vmem>>, vector<1x32xf32>
    %6 = vector.broadcast %5 : vector<1x32xf32> to vector<8x32xf32>
    %7 = arith.addf %4, %6 : vector<8x32xf32>
    %c0_6 = arith.constant 0 : index
    %c0_7 = arith.constant 0 : index
    %8 = vector.load %arg4[%c0_6, %c0_7] : memref<8x32xf32, #tpu.memory_space<vmem>>, vector<8x32xf32>
    %9 = arith.addf %7, %8 : vector<8x32xf32>
    %c0_8 = arith.constant 0 : index
    %c0_9 = arith.constant 0 : index
    %10 = vector.load %arg5[%c0_8, %c0_9] : memref<32x96xbf16, #tpu.memory_space<vmem>>, vector<32x96xbf16>
    %c0_10 = arith.constant 0 : index
    %c0_11 = arith.constant 0 : index
    %11 = vector.load %arg6[%c0_10, %c0_11] : memref<1x96xf32, #tpu.memory_space<vmem>>, vector<1x96xf32>
    %c0_12 = arith.constant 0 : index
    %c0_13 = arith.constant 0 : index
    %12 = vector.load %arg7[%c0_12, %c0_13] : memref<32x32xbf16, #tpu.memory_space<vmem>>, vector<32x32xbf16>
    %c0_14 = arith.constant 0 : index
    %c0_15 = arith.constant 0 : index
    %13 = vector.load %arg8[%c0_14, %c0_15] : memref<1x32xf32, #tpu.memory_space<vmem>>, vector<1x32xf32>
    %c0_16 = arith.constant 0 : index
    %c0_17 = arith.constant 0 : index
    %14 = vector.load %arg9[%c0_16, %c0_17] : memref<1x32xf32, #tpu.memory_space<vmem>>, vector<1x32xf32>
    %c0_18 = arith.constant 0 : index
    %c0_19 = arith.constant 0 : index
    %15 = vector.load %arg10[%c0_18, %c0_19] : memref<1x32xf32, #tpu.memory_space<vmem>>, vector<1x32xf32>
    %c0_20 = arith.constant 0 : index
    %c0_21 = arith.constant 0 : index
    %16 = vector.load %arg11[%c0_20, %c0_21] : memref<32x128xbf16, #tpu.memory_space<vmem>>, vector<32x128xbf16>
    %c0_22 = arith.constant 0 : index
    %c0_23 = arith.constant 0 : index
    %17 = vector.load %arg12[%c0_22, %c0_23] : memref<1x128xf32, #tpu.memory_space<vmem>>, vector<1x128xf32>
    %c0_24 = arith.constant 0 : index
    %c0_25 = arith.constant 0 : index
    %18 = vector.load %arg13[%c0_24, %c0_25] : memref<128x32xbf16, #tpu.memory_space<vmem>>, vector<128x32xbf16>
    %c0_26 = arith.constant 0 : index
    %c0_27 = arith.constant 0 : index
    %19 = vector.load %arg14[%c0_26, %c0_27] : memref<1x32xf32, #tpu.memory_space<vmem>>, vector<1x32xf32>
    %c0_28 = arith.constant 0 : index
    %c0_29 = arith.constant 0 : index
    %20 = vector.load %arg15[%c0_28, %c0_29] : memref<1x32xf32, #tpu.memory_space<vmem>>, vector<1x32xf32>
    %c0_30 = arith.constant 0 : index
    %c0_31 = arith.constant 0 : index
    %21 = vector.load %arg16[%c0_30, %c0_31] : memref<1x32xf32, #tpu.memory_space<vmem>>, vector<1x32xf32>
    %22 = arith.truncf %9 : vector<8x32xf32> to vector<8x32xbf16>
    %cst_32 = arith.constant dense<0.000000e+00> : vector<8x96xf32>
    %23 = tpu.matmul %22, %10, %cst_32 {dimension_numbers = #tpu.dot_dimension_numbers<[1], [0], [0], [1], [0, 0, 1, 1], [], []>} : vector<8x32xbf16>, vector<32x96xbf16>, vector<8x96xf32> -> vector<8x96xf32>
    %24 = vector.broadcast %11 : vector<1x96xf32> to vector<8x96xf32>
    %25 = arith.addf %23, %24 : vector<8x96xf32>
    %26 = vector.extract_strided_slice %25 {offsets = [0, 0], sizes = [8, 16], strides = [1, 1]} : vector<8x96xf32> to vector<8x16xf32>
    %27 = vector.extract_strided_slice %25 {offsets = [0, 16], sizes = [8, 16], strides = [1, 1]} : vector<8x96xf32> to vector<8x16xf32>
    %28 = vector.shape_cast %26 : vector<8x16xf32> to vector<1x8x16xf32>
    %29 = vector.shape_cast %27 : vector<8x16xf32> to vector<1x8x16xf32>
    %30 = tpu.concatenate %28, %29 in 0 : vector<1x8x16xf32>, vector<1x8x16xf32> -> vector<2x8x16xf32>
    %31 = vector.extract_strided_slice %25 {offsets = [0, 32], sizes = [8, 16], strides = [1, 1]} : vector<8x96xf32> to vector<8x16xf32>
    %32 = vector.extract_strided_slice %25 {offsets = [0, 48], sizes = [8, 16], strides = [1, 1]} : vector<8x96xf32> to vector<8x16xf32>
    %33 = vector.shape_cast %31 : vector<8x16xf32> to vector<1x8x16xf32>
    %34 = vector.shape_cast %32 : vector<8x16xf32> to vector<1x8x16xf32>
    %35 = tpu.concatenate %33, %34 in 0 : vector<1x8x16xf32>, vector<1x8x16xf32> -> vector<2x8x16xf32>
    %36 = vector.extract_strided_slice %25 {offsets = [0, 64], sizes = [8, 16], strides = [1, 1]} : vector<8x96xf32> to vector<8x16xf32>
    %37 = vector.extract_strided_slice %25 {offsets = [0, 80], sizes = [8, 16], strides = [1, 1]} : vector<8x96xf32> to vector<8x16xf32>
    %38 = vector.shape_cast %36 : vector<8x16xf32> to vector<1x8x16xf32>
    %39 = vector.shape_cast %37 : vector<8x16xf32> to vector<1x8x16xf32>
    %40 = tpu.concatenate %38, %39 in 0 : vector<1x8x16xf32>, vector<1x8x16xf32> -> vector<2x8x16xf32>
    %41 = arith.truncf %30 : vector<2x8x16xf32> to vector<2x8x16xbf16>
    %42 = arith.truncf %35 : vector<2x8x16xf32> to vector<2x8x16xbf16>
    "tpu.trace_start"() <{level = 10 : i32, message = "hqd,hkd->hqk"}> : () -> ()
    %cst_33 = arith.constant dense<0.000000e+00> : vector<2x8x8xf32>
    %43 = tpu.matmul %41, %42, %cst_33 {dimension_numbers = #tpu.dot_dimension_numbers<[2], [2], [1], [1], [0, 0, 0, 1, 1, 1], [0], [0]>} : vector<2x8x16xbf16>, vector<2x8x16xbf16>, vector<2x8x8xf32> -> vector<2x8x8xf32>
    "tpu.trace_stop"() : () -> ()
    %cst_34 = arith.constant dense<0xFF800000> : vector<2x8xf32>
    %44 = vector.multi_reduction <maximumf>, %43, %cst_34 [2] : vector<2x8x8xf32> to vector<2x8xf32>
    %45 = vector.shape_cast %44 : vector<2x8xf32> to vector<2x8x1xf32>
    %46 = vector.broadcast %45 : vector<2x8x1xf32> to vector<2x8x8xf32>
    %47 = arith.subf %43, %46 : vector<2x8x8xf32>
    %48 = math.exp %47 : vector<2x8x8xf32>
    %cst_35 = arith.constant dense<0.000000e+00> : vector<2x8xf32>
    %49 = vector.multi_reduction <add>, %48, %cst_35 [2] : vector<2x8x8xf32> to vector<2x8xf32>
    %50 = vector.shape_cast %49 : vector<2x8xf32> to vector<2x8x1xf32>
    %51 = tpu.reciprocal %50 {approx = true} : vector<2x8x1xf32> -> vector<2x8x1xf32>
    %52 = vector.broadcast %51 : vector<2x8x1xf32> to vector<2x8x8xf32>
    %53 = arith.mulf %48, %52 : vector<2x8x8xf32>
    %54 = arith.truncf %53 : vector<2x8x8xf32> to vector<2x8x8xbf16>
    %55 = arith.truncf %40 : vector<2x8x16xf32> to vector<2x8x16xbf16>
    "tpu.trace_start"() <{level = 10 : i32, message = "hqk,hkd->hqd"}> : () -> ()
    %cst_36 = arith.constant dense<0.000000e+00> : vector<2x8x16xf32>
    %56 = tpu.matmul %54, %55, %cst_36 {dimension_numbers = #tpu.dot_dimension_numbers<[2], [1], [1], [2], [0, 0, 0, 1, 1, 2], [0], [0]>} : vector<2x8x8xbf16>, vector<2x8x16xbf16>, vector<2x8x16xf32> -> vector<2x8x16xf32>
    "tpu.trace_stop"() : () -> ()
    %57 = vector.extract_strided_slice %56 {offsets = [0, 0, 0], sizes = [1, 8, 16], strides = [1, 1, 1]} : vector<2x8x16xf32> to vector<1x8x16xf32>
    %58 = vector.shape_cast %57 : vector<1x8x16xf32> to vector<8x16xf32>
    %59 = vector.extract_strided_slice %56 {offsets = [1, 0, 0], sizes = [1, 8, 16], strides = [1, 1, 1]} : vector<2x8x16xf32> to vector<1x8x16xf32>
    %60 = vector.shape_cast %59 : vector<1x8x16xf32> to vector<8x16xf32>
    %61 = tpu.concatenate %58, %60 in 1 : vector<8x16xf32>, vector<8x16xf32> -> vector<8x32xf32>
    %62 = arith.truncf %61 : vector<8x32xf32> to vector<8x32xbf16>
    %cst_37 = arith.constant dense<0.000000e+00> : vector<8x32xf32>
    %63 = tpu.matmul %62, %12, %cst_37 {dimension_numbers = #tpu.dot_dimension_numbers<[1], [0], [0], [1], [0, 0, 1, 1], [], []>} : vector<8x32xbf16>, vector<32x32xbf16>, vector<8x32xf32> -> vector<8x32xf32>
    %64 = vector.broadcast %13 : vector<1x32xf32> to vector<8x32xf32>
    %65 = arith.addf %63, %64 : vector<8x32xf32>
    %66 = arith.addf %9, %65 : vector<8x32xf32>
    %cst_38 = arith.constant dense<0.000000e+00> : vector<8xf32>
    %67 = vector.multi_reduction <add>, %66, %cst_38 [1] : vector<8x32xf32> to vector<8xf32>
    %68 = vector.shape_cast %67 : vector<8xf32> to vector<8x1xf32>
    %cst_39 = arith.constant 3.200000e+01 : f32
    %69 = vector.broadcast %cst_39 : f32 to vector<8x1xf32>
    %70 = arith.divf %68, %69 : vector<8x1xf32>
    %71 = vector.broadcast %70 : vector<8x1xf32> to vector<8x32xf32>
    %72 = arith.subf %66, %71 : vector<8x32xf32>
    %73 = arith.mulf %72, %72 : vector<8x32xf32>
    %cst_40 = arith.constant dense<0.000000e+00> : vector<8xf32>
    %74 = vector.multi_reduction <add>, %73, %cst_40 [1] : vector<8x32xf32> to vector<8xf32>
    %75 = vector.shape_cast %74 : vector<8xf32> to vector<8x1xf32>
    %cst_41 = arith.constant 3.200000e+01 : f32
    %76 = vector.broadcast %cst_41 : f32 to vector<8x1xf32>
    %77 = arith.divf %75, %76 : vector<8x1xf32>
    %cst_42 = arith.constant 9.99999974E-6 : f32
    %78 = vector.broadcast %cst_42 : f32 to vector<8x1xf32>
    %79 = arith.addf %77, %78 : vector<8x1xf32>
    %80 = math.rsqrt %79 : vector<8x1xf32>
    %81 = vector.broadcast %80 : vector<8x1xf32> to vector<8x32xf32>
    %82 = arith.mulf %72, %81 : vector<8x32xf32>
    %83 = vector.broadcast %14 : vector<1x32xf32> to vector<8x32xf32>
    %84 = arith.mulf %82, %83 : vector<8x32xf32>
    %85 = vector.broadcast %15 : vector<1x32xf32> to vector<8x32xf32>
    %86 = arith.addf %84, %85 : vector<8x32xf32>
    %87 = arith.truncf %86 : vector<8x32xf32> to vector<8x32xbf16>
    %cst_43 = arith.constant dense<0.000000e+00> : vector<8x128xf32>
    %88 = tpu.matmul %87, %16, %cst_43 {dimension_numbers = #tpu.dot_dimension_numbers<[1], [0], [0], [1], [0, 0, 1, 1], [], []>} : vector<8x32xbf16>, vector<32x128xbf16>, vector<8x128xf32> -> vector<8x128xf32>
    %89 = vector.broadcast %17 : vector<1x128xf32> to vector<8x128xf32>
    %90 = arith.addf %88, %89 : vector<8x128xf32>
    %cst_44 = arith.constant 0.000000e+00 : f32
    %91 = vector.broadcast %cst_44 : f32 to vector<8x128xf32>
    %92 = arith.maximumf %90, %91 : vector<8x128xf32>
    %93 = arith.truncf %92 : vector<8x128xf32> to vector<8x128xbf16>
    %cst_45 = arith.constant dense<0.000000e+00> : vector<8x32xf32>
    %94 = tpu.matmul %93, %18, %cst_45 {dimension_numbers = #tpu.dot_dimension_numbers<[1], [0], [0], [1], [0, 0, 1, 1], [], []>} : vector<8x128xbf16>, vector<128x32xbf16>, vector<8x32xf32> -> vector<8x32xf32>
    %95 = vector.broadcast %19 : vector<1x32xf32> to vector<8x32xf32>
    %96 = arith.addf %94, %95 : vector<8x32xf32>
    %97 = arith.addf %86, %96 : vector<8x32xf32>
    %cst_46 = arith.constant dense<0.000000e+00> : vector<8xf32>
    %98 = vector.multi_reduction <add>, %97, %cst_46 [1] : vector<8x32xf32> to vector<8xf32>
    %99 = vector.shape_cast %98 : vector<8xf32> to vector<8x1xf32>
    %cst_47 = arith.constant 3.200000e+01 : f32
    %100 = vector.broadcast %cst_47 : f32 to vector<8x1xf32>
    %101 = arith.divf %99, %100 : vector<8x1xf32>
    %102 = vector.broadcast %101 : vector<8x1xf32> to vector<8x32xf32>
    %103 = arith.subf %97, %102 : vector<8x32xf32>
    %104 = arith.mulf %103, %103 : vector<8x32xf32>
    %cst_48 = arith.constant dense<0.000000e+00> : vector<8xf32>
    %105 = vector.multi_reduction <add>, %104, %cst_48 [1] : vector<8x32xf32> to vector<8xf32>
    %106 = vector.shape_cast %105 : vector<8xf32> to vector<8x1xf32>
    %cst_49 = arith.constant 3.200000e+01 : f32
    %107 = vector.broadcast %cst_49 : f32 to vector<8x1xf32>
    %108 = arith.divf %106, %107 : vector<8x1xf32>
    %cst_50 = arith.constant 9.99999974E-6 : f32
    %109 = vector.broadcast %cst_50 : f32 to vector<8x1xf32>
    %110 = arith.addf %108, %109 : vector<8x1xf32>
    %111 = math.rsqrt %110 : vector<8x1xf32>
    %112 = vector.broadcast %111 : vector<8x1xf32> to vector<8x32xf32>
    %113 = arith.mulf %103, %112 : vector<8x32xf32>
    %114 = vector.broadcast %20 : vector<1x32xf32> to vector<8x32xf32>
    %115 = arith.mulf %113, %114 : vector<8x32xf32>
    %116 = vector.broadcast %21 : vector<1x32xf32> to vector<8x32xf32>
    %117 = arith.addf %115, %116 : vector<8x32xf32>
    %c0_51 = arith.constant 0 : index
    %c0_52 = arith.constant 0 : index
    %118 = vector.load %arg17[%c0_51, %c0_52] : memref<32x96xbf16, #tpu.memory_space<vmem>>, vector<32x96xbf16>
    %c0_53 = arith.constant 0 : index
    %c0_54 = arith.constant 0 : index
    %119 = vector.load %arg18[%c0_53, %c0_54] : memref<1x96xf32, #tpu.memory_space<vmem>>, vector<1x96xf32>
    %c0_55 = arith.constant 0 : index
    %c0_56 = arith.constant 0 : index
    %120 = vector.load %arg19[%c0_55, %c0_56] : memref<32x32xbf16, #tpu.memory_space<vmem>>, vector<32x32xbf16>
    %c0_57 = arith.constant 0 : index
    %c0_58 = arith.constant 0 : index
    %121 = vector.load %arg20[%c0_57, %c0_58] : memref<1x32xf32, #tpu.memory_space<vmem>>, vector<1x32xf32>
    %c0_59 = arith.constant 0 : index
    %c0_60 = arith.constant 0 : index
    %122 = vector.load %arg21[%c0_59, %c0_60] : memref<1x32xf32, #tpu.memory_space<vmem>>, vector<1x32xf32>
    %c0_61 = arith.constant 0 : index
    %c0_62 = arith.constant 0 : index
    %123 = vector.load %arg22[%c0_61, %c0_62] : memref<1x32xf32, #tpu.memory_space<vmem>>, vector<1x32xf32>
    %c0_63 = arith.constant 0 : index
    %c0_64 = arith.constant 0 : index
    %124 = vector.load %arg23[%c0_63, %c0_64] : memref<32x128xbf16, #tpu.memory_space<vmem>>, vector<32x128xbf16>
    %c0_65 = arith.constant 0 : index
    %c0_66 = arith.constant 0 : index
    %125 = vector.load %arg24[%c0_65, %c0_66] : memref<1x128xf32, #tpu.memory_space<vmem>>, vector<1x128xf32>
    %c0_67 = arith.constant 0 : index
    %c0_68 = arith.constant 0 : index
    %126 = vector.load %arg25[%c0_67, %c0_68] : memref<128x32xbf16, #tpu.memory_space<vmem>>, vector<128x32xbf16>
    %c0_69 = arith.constant 0 : index
    %c0_70 = arith.constant 0 : index
    %127 = vector.load %arg26[%c0_69, %c0_70] : memref<1x32xf32, #tpu.memory_space<vmem>>, vector<1x32xf32>
    %c0_71 = arith.constant 0 : index
    %c0_72 = arith.constant 0 : index
    %128 = vector.load %arg27[%c0_71, %c0_72] : memref<1x32xf32, #tpu.memory_space<vmem>>, vector<1x32xf32>
    %c0_73 = arith.constant 0 : index
    %c0_74 = arith.constant 0 : index
    %129 = vector.load %arg28[%c0_73, %c0_74] : memref<1x32xf32, #tpu.memory_space<vmem>>, vector<1x32xf32>
    %130 = arith.truncf %117 : vector<8x32xf32> to vector<8x32xbf16>
    %cst_75 = arith.constant dense<0.000000e+00> : vector<8x96xf32>
    %131 = tpu.matmul %130, %118, %cst_75 {dimension_numbers = #tpu.dot_dimension_numbers<[1], [0], [0], [1], [0, 0, 1, 1], [], []>} : vector<8x32xbf16>, vector<32x96xbf16>, vector<8x96xf32> -> vector<8x96xf32>
    %132 = vector.broadcast %119 : vector<1x96xf32> to vector<8x96xf32>
    %133 = arith.addf %131, %132 : vector<8x96xf32>
    %134 = vector.extract_strided_slice %133 {offsets = [0, 0], sizes = [8, 16], strides = [1, 1]} : vector<8x96xf32> to vector<8x16xf32>
    %135 = vector.extract_strided_slice %133 {offsets = [0, 16], sizes = [8, 16], strides = [1, 1]} : vector<8x96xf32> to vector<8x16xf32>
    %136 = vector.shape_cast %134 : vector<8x16xf32> to vector<1x8x16xf32>
    %137 = vector.shape_cast %135 : vector<8x16xf32> to vector<1x8x16xf32>
    %138 = tpu.concatenate %136, %137 in 0 : vector<1x8x16xf32>, vector<1x8x16xf32> -> vector<2x8x16xf32>
    %139 = vector.extract_strided_slice %133 {offsets = [0, 32], sizes = [8, 16], strides = [1, 1]} : vector<8x96xf32> to vector<8x16xf32>
    %140 = vector.extract_strided_slice %133 {offsets = [0, 48], sizes = [8, 16], strides = [1, 1]} : vector<8x96xf32> to vector<8x16xf32>
    %141 = vector.shape_cast %139 : vector<8x16xf32> to vector<1x8x16xf32>
    %142 = vector.shape_cast %140 : vector<8x16xf32> to vector<1x8x16xf32>
    %143 = tpu.concatenate %141, %142 in 0 : vector<1x8x16xf32>, vector<1x8x16xf32> -> vector<2x8x16xf32>
    %144 = vector.extract_strided_slice %133 {offsets = [0, 64], sizes = [8, 16], strides = [1, 1]} : vector<8x96xf32> to vector<8x16xf32>
    %145 = vector.extract_strided_slice %133 {offsets = [0, 80], sizes = [8, 16], strides = [1, 1]} : vector<8x96xf32> to vector<8x16xf32>
    %146 = vector.shape_cast %144 : vector<8x16xf32> to vector<1x8x16xf32>
    %147 = vector.shape_cast %145 : vector<8x16xf32> to vector<1x8x16xf32>
    %148 = tpu.concatenate %146, %147 in 0 : vector<1x8x16xf32>, vector<1x8x16xf32> -> vector<2x8x16xf32>
    %149 = arith.truncf %138 : vector<2x8x16xf32> to vector<2x8x16xbf16>
    %150 = arith.truncf %143 : vector<2x8x16xf32> to vector<2x8x16xbf16>
    "tpu.trace_start"() <{level = 10 : i32, message = "hqd,hkd->hqk"}> : () -> ()
    %cst_76 = arith.constant dense<0.000000e+00> : vector<2x8x8xf32>
    %151 = tpu.matmul %149, %150, %cst_76 {dimension_numbers = #tpu.dot_dimension_numbers<[2], [2], [1], [1], [0, 0, 0, 1, 1, 1], [0], [0]>} : vector<2x8x16xbf16>, vector<2x8x16xbf16>, vector<2x8x8xf32> -> vector<2x8x8xf32>
    "tpu.trace_stop"() : () -> ()
    %cst_77 = arith.constant dense<0xFF800000> : vector<2x8xf32>
    %152 = vector.multi_reduction <maximumf>, %151, %cst_77 [2] : vector<2x8x8xf32> to vector<2x8xf32>
    %153 = vector.shape_cast %152 : vector<2x8xf32> to vector<2x8x1xf32>
    %154 = vector.broadcast %153 : vector<2x8x1xf32> to vector<2x8x8xf32>
    %155 = arith.subf %151, %154 : vector<2x8x8xf32>
    %156 = math.exp %155 : vector<2x8x8xf32>
    %cst_78 = arith.constant dense<0.000000e+00> : vector<2x8xf32>
    %157 = vector.multi_reduction <add>, %156, %cst_78 [2] : vector<2x8x8xf32> to vector<2x8xf32>
    %158 = vector.shape_cast %157 : vector<2x8xf32> to vector<2x8x1xf32>
    %159 = tpu.reciprocal %158 {approx = true} : vector<2x8x1xf32> -> vector<2x8x1xf32>
    %160 = vector.broadcast %159 : vector<2x8x1xf32> to vector<2x8x8xf32>
    %161 = arith.mulf %156, %160 : vector<2x8x8xf32>
    %162 = arith.truncf %161 : vector<2x8x8xf32> to vector<2x8x8xbf16>
    %163 = arith.truncf %148 : vector<2x8x16xf32> to vector<2x8x16xbf16>
    "tpu.trace_start"() <{level = 10 : i32, message = "hqk,hkd->hqd"}> : () -> ()
    %cst_79 = arith.constant dense<0.000000e+00> : vector<2x8x16xf32>
    %164 = tpu.matmul %162, %163, %cst_79 {dimension_numbers = #tpu.dot_dimension_numbers<[2], [1], [1], [2], [0, 0, 0, 1, 1, 2], [0], [0]>} : vector<2x8x8xbf16>, vector<2x8x16xbf16>, vector<2x8x16xf32> -> vector<2x8x16xf32>
    "tpu.trace_stop"() : () -> ()
    %165 = vector.extract_strided_slice %164 {offsets = [0, 0, 0], sizes = [1, 8, 16], strides = [1, 1, 1]} : vector<2x8x16xf32> to vector<1x8x16xf32>
    %166 = vector.shape_cast %165 : vector<1x8x16xf32> to vector<8x16xf32>
    %167 = vector.extract_strided_slice %164 {offsets = [1, 0, 0], sizes = [1, 8, 16], strides = [1, 1, 1]} : vector<2x8x16xf32> to vector<1x8x16xf32>
    %168 = vector.shape_cast %167 : vector<1x8x16xf32> to vector<8x16xf32>
    %169 = tpu.concatenate %166, %168 in 1 : vector<8x16xf32>, vector<8x16xf32> -> vector<8x32xf32>
    %170 = arith.truncf %169 : vector<8x32xf32> to vector<8x32xbf16>
    %cst_80 = arith.constant dense<0.000000e+00> : vector<8x32xf32>
    %171 = tpu.matmul %170, %120, %cst_80 {dimension_numbers = #tpu.dot_dimension_numbers<[1], [0], [0], [1], [0, 0, 1, 1], [], []>} : vector<8x32xbf16>, vector<32x32xbf16>, vector<8x32xf32> -> vector<8x32xf32>
    %172 = vector.broadcast %121 : vector<1x32xf32> to vector<8x32xf32>
    %173 = arith.addf %171, %172 : vector<8x32xf32>
    %174 = arith.addf %117, %173 : vector<8x32xf32>
    %cst_81 = arith.constant dense<0.000000e+00> : vector<8xf32>
    %175 = vector.multi_reduction <add>, %174, %cst_81 [1] : vector<8x32xf32> to vector<8xf32>
    %176 = vector.shape_cast %175 : vector<8xf32> to vector<8x1xf32>
    %cst_82 = arith.constant 3.200000e+01 : f32
    %177 = vector.broadcast %cst_82 : f32 to vector<8x1xf32>
    %178 = arith.divf %176, %177 : vector<8x1xf32>
    %179 = vector.broadcast %178 : vector<8x1xf32> to vector<8x32xf32>
    %180 = arith.subf %174, %179 : vector<8x32xf32>
    %181 = arith.mulf %180, %180 : vector<8x32xf32>
    %cst_83 = arith.constant dense<0.000000e+00> : vector<8xf32>
    %182 = vector.multi_reduction <add>, %181, %cst_83 [1] : vector<8x32xf32> to vector<8xf32>
    %183 = vector.shape_cast %182 : vector<8xf32> to vector<8x1xf32>
    %cst_84 = arith.constant 3.200000e+01 : f32
    %184 = vector.broadcast %cst_84 : f32 to vector<8x1xf32>
    %185 = arith.divf %183, %184 : vector<8x1xf32>
    %cst_85 = arith.constant 9.99999974E-6 : f32
    %186 = vector.broadcast %cst_85 : f32 to vector<8x1xf32>
    %187 = arith.addf %185, %186 : vector<8x1xf32>
    %188 = math.rsqrt %187 : vector<8x1xf32>
    %189 = vector.broadcast %188 : vector<8x1xf32> to vector<8x32xf32>
    %190 = arith.mulf %180, %189 : vector<8x32xf32>
    %191 = vector.broadcast %122 : vector<1x32xf32> to vector<8x32xf32>
    %192 = arith.mulf %190, %191 : vector<8x32xf32>
    %193 = vector.broadcast %123 : vector<1x32xf32> to vector<8x32xf32>
    %194 = arith.addf %192, %193 : vector<8x32xf32>
    %195 = arith.truncf %194 : vector<8x32xf32> to vector<8x32xbf16>
    %cst_86 = arith.constant dense<0.000000e+00> : vector<8x128xf32>
    %196 = tpu.matmul %195, %124, %cst_86 {dimension_numbers = #tpu.dot_dimension_numbers<[1], [0], [0], [1], [0, 0, 1, 1], [], []>} : vector<8x32xbf16>, vector<32x128xbf16>, vector<8x128xf32> -> vector<8x128xf32>
    %197 = vector.broadcast %125 : vector<1x128xf32> to vector<8x128xf32>
    %198 = arith.addf %196, %197 : vector<8x128xf32>
    %cst_87 = arith.constant 0.000000e+00 : f32
    %199 = vector.broadcast %cst_87 : f32 to vector<8x128xf32>
    %200 = arith.maximumf %198, %199 : vector<8x128xf32>
    %201 = arith.truncf %200 : vector<8x128xf32> to vector<8x128xbf16>
    %cst_88 = arith.constant dense<0.000000e+00> : vector<8x32xf32>
    %202 = tpu.matmul %201, %126, %cst_88 {dimension_numbers = #tpu.dot_dimension_numbers<[1], [0], [0], [1], [0, 0, 1, 1], [], []>} : vector<8x128xbf16>, vector<128x32xbf16>, vector<8x32xf32> -> vector<8x32xf32>
    %203 = vector.broadcast %127 : vector<1x32xf32> to vector<8x32xf32>
    %204 = arith.addf %202, %203 : vector<8x32xf32>
    %205 = arith.addf %194, %204 : vector<8x32xf32>
    %cst_89 = arith.constant dense<0.000000e+00> : vector<8xf32>
    %206 = vector.multi_reduction <add>, %205, %cst_89 [1] : vector<8x32xf32> to vector<8xf32>
    %207 = vector.shape_cast %206 : vector<8xf32> to vector<8x1xf32>
    %cst_90 = arith.constant 3.200000e+01 : f32
    %208 = vector.broadcast %cst_90 : f32 to vector<8x1xf32>
    %209 = arith.divf %207, %208 : vector<8x1xf32>
    %210 = vector.broadcast %209 : vector<8x1xf32> to vector<8x32xf32>
    %211 = arith.subf %205, %210 : vector<8x32xf32>
    %212 = arith.mulf %211, %211 : vector<8x32xf32>
    %cst_91 = arith.constant dense<0.000000e+00> : vector<8xf32>
    %213 = vector.multi_reduction <add>, %212, %cst_91 [1] : vector<8x32xf32> to vector<8xf32>
    %214 = vector.shape_cast %213 : vector<8xf32> to vector<8x1xf32>
    %cst_92 = arith.constant 3.200000e+01 : f32
    %215 = vector.broadcast %cst_92 : f32 to vector<8x1xf32>
    %216 = arith.divf %214, %215 : vector<8x1xf32>
    %cst_93 = arith.constant 9.99999974E-6 : f32
    %217 = vector.broadcast %cst_93 : f32 to vector<8x1xf32>
    %218 = arith.addf %216, %217 : vector<8x1xf32>
    %219 = math.rsqrt %218 : vector<8x1xf32>
    %220 = vector.broadcast %219 : vector<8x1xf32> to vector<8x32xf32>
    %221 = arith.mulf %211, %220 : vector<8x32xf32>
    %222 = vector.broadcast %128 : vector<1x32xf32> to vector<8x32xf32>
    %223 = arith.mulf %221, %222 : vector<8x32xf32>
    %224 = vector.broadcast %129 : vector<1x32xf32> to vector<8x32xf32>
    %225 = arith.addf %223, %224 : vector<8x32xf32>
    %226 = arith.truncf %225 : vector<8x32xf32> to vector<8x32xbf16>
    %c0_94 = arith.constant 0 : index
    %c0_95 = arith.constant 0 : index
    %227 = vector.load %arg29[%c0_94, %c0_95] : memref<32x640xbf16, #tpu.memory_space<vmem>>, vector<32x640xbf16>
    %cst_96 = arith.constant dense<0.000000e+00> : vector<8x640xf32>
    %228 = tpu.matmul %226, %227, %cst_96 {dimension_numbers = #tpu.dot_dimension_numbers<[1], [0], [0], [1], [0, 0, 1, 1], [], []>} : vector<8x32xbf16>, vector<32x640xbf16>, vector<8x640xf32> -> vector<8x640xf32>
    %c0_97 = arith.constant 0 : index
    %c0_98 = arith.constant 0 : index
    %229 = vector.load %arg30[%c0_97, %c0_98] : memref<1x640xf32, #tpu.memory_space<vmem>>, vector<1x640xf32>
    %230 = vector.broadcast %229 : vector<1x640xf32> to vector<8x640xf32>
    %231 = arith.addf %228, %230 : vector<8x640xf32>
    %c0_99 = arith.constant 0 : index
    %c0_100 = arith.constant 0 : index
    %c0_101 = arith.constant 0 : index
    %232 = vector.load %arg31[%c0_99, %c0_100, %c0_101] : memref<1x8x640xf32, #tpu.memory_space<vmem>>, vector<1x8x640xf32>
    %233 = vector.shape_cast %232 : vector<1x8x640xf32> to vector<8x640xf32>
    %234 = arith.addf %231, %233 : vector<8x640xf32>
    %cst_102 = arith.constant dense<0xFF800000> : vector<8xf32>
    %235 = vector.multi_reduction <maximumf>, %234, %cst_102 [1] : vector<8x640xf32> to vector<8xf32>
    %236 = vector.shape_cast %235 : vector<8xf32> to vector<8x1xf32>
    %237 = tpu.iota {dimensions = array<i32: 1>} : vector<8x640xi32>
    %238 = vector.broadcast %236 : vector<8x1xf32> to vector<8x640xf32>
    %239 = arith.cmpf oeq, %234, %238 : vector<8x640xf32>
    %c640_i32 = arith.constant 640 : i32
    %240 = vector.broadcast %c640_i32 : i32 to vector<8x640xi32>
    %241 = arith.select %239, %237, %240 : vector<8x640xi1>, vector<8x640xi32>
    %cst_103 = arith.constant dense<2147483647> : vector<8xi32>
    %242 = vector.multi_reduction <minsi>, %241, %cst_103 [1] : vector<8x640xi32> to vector<8xi32>
    %243 = vector.shape_cast %242 : vector<8xi32> to vector<8x1xi32>
    %244 = vector.broadcast %243 : vector<8x1xi32> to vector<8x640xi32>
    %245 = arith.cmpi eq, %237, %244 : vector<8x640xi32>
    %246 = arith.extui %245 : vector<8x640xi1> to vector<8x640xi32>
    %247 = arith.sitofp %246 : vector<8x640xi32> to vector<8x640xf32>
    %248 = vector.shape_cast %247 : vector<8x640xf32> to vector<1x8x640xf32>
    %c0_104 = arith.constant 0 : index
    %c0_105 = arith.constant 0 : index
    %c0_106 = arith.constant 0 : index
    %249 = vector.load %arg32[%c0_104, %c0_105, %c0_106] : memref<1x8x640xf32, #tpu.memory_space<vmem>>, vector<1x8x640xf32>
    tpu.vector_store %arg32[%c0_104, %c0_105, %c0_106], %248 {strides = array<i32>} : memref<1x8x640xf32, #tpu.memory_space<vmem>>, vector<1x8x640xf32>,
    return
  }
  func.func @transform_0(%arg0: i32) -> (i32, i32, i32) {
    %c0_i32 = arith.constant 0 : i32
    %c0_i32_0 = arith.constant 0 : i32
    %c0_i32_1 = arith.constant 0 : i32
    return %arg0, %c0_i32, %c0_i32_0 : i32, i32, i32
  }
  func.func @transform_1(%arg0: i32) -> (i32, i32) {
    %c0_i32 = arith.constant 0 : i32
    %c0_i32_0 = arith.constant 0 : i32
    %c0_i32_1 = arith.constant 0 : i32
    return %c0_i32, %c0_i32_0 : i32, i32
  }
  func.func @transform_2(%arg0: i32) -> (i32, i32) {
    %c0_i32 = arith.constant 0 : i32
    %c0_i32_0 = arith.constant 0 : i32
    %c0_i32_1 = arith.constant 0 : i32
    return %c0_i32, %c0_i32_0 : i32, i32
  }
  func.func @transform_3(%arg0: i32) -> (i32, i32) {
    %c0_i32 = arith.constant 0 : i32
    %c0_i32_0 = arith.constant 0 : i32
    %c0_i32_1 = arith.constant 0 : i32
    return %c0_i32, %c0_i32_0 : i32, i32
  }
  func.func @transform_4(%arg0: i32) -> (i32, i32) {
    %c0_i32 = arith.constant 0 : i32
    %c0_i32_0 = arith.constant 0 : i32
    %c0_i32_1 = arith.constant 0 : i32
    return %c0_i32, %c0_i32_0 : i32, i32
  }
  func.func @transform_5(%arg0: i32) -> (i32, i32) {
    %c0_i32 = arith.constant 0 : i32
    %c0_i32_0 = arith.constant 0 : i32
    %c0_i32_1 = arith.constant 0 : i32
    return %c0_i32, %c0_i32_0 : i32, i32
  }
  func.func @transform_6(%arg0: i32) -> (i32, i32) {
    %c0_i32 = arith.constant 0 : i32
    %c0_i32_0 = arith.constant 0 : i32
    %c0_i32_1 = arith.constant 0 : i32
    return %c0_i32, %c0_i32_0 : i32, i32
  }
  func.func @transform_7(%arg0: i32) -> (i32, i32) {
    %c0_i32 = arith.constant 0 : i32
    %c0_i32_0 = arith.constant 0 : i32
    %c0_i32_1 = arith.constant 0 : i32
    return %c0_i32, %c0_i32_0 : i32, i32
  }
  func.func @transform_8(%arg0: i32) -> (i32, i32) {
    %c0_i32 = arith.constant 0 : i32
    %c0_i32_0 = arith.constant 0 : i32
    %c0_i32_1 = arith.constant 0 : i32
    return %c0_i32, %c0_i32_0 : i32, i32
  }
  func.func @transform_9(%arg0: i32) -> (i32, i32) {
    %c0_i32 = arith.constant 0 : i32
    %c0_i32_0 = arith.constant 0 : i32
    %c0_i32_1 = arith.constant 0 : i32
    return %c0_i32, %c0_i32_0 : i32, i32
  }
  func.func @transform_10(%arg0: i32) -> (i32, i32) {
    %c0_i32 = arith.constant 0 : i32
    %c0_i32_0 = arith.constant 0 : i32
    %c0_i32_1 = arith.constant 0 : i32
    return %c0_i32, %c0_i32_0 : i32, i32
  }
  func.func @transform_11(%arg0: i32) -> (i32, i32) {
    %c0_i32 = arith.constant 0 : i32
    %c0_i32_0 = arith.constant 0 : i32
    %c0_i32_1 = arith.constant 0 : i32
    return %c0_i32, %c0_i32_0 : i32, i32
  }
  func.func @transform_12(%arg0: i32) -> (i32, i32) {
    %c0_i32 = arith.constant 0 : i32
    %c0_i32_0 = arith.constant 0 : i32
    %c0_i32_1 = arith.constant 0 : i32
    return %c0_i32, %c0_i32_0 : i32, i32
  }
  func.func @transform_13(%arg0: i32) -> (i32, i32) {
    %c0_i32 = arith.constant 0 : i32
    %c0_i32_0 = arith.constant 0 : i32
    %c0_i32_1 = arith.constant 0 : i32
    return %c0_i32, %c0_i32_0 : i32, i32
  }
  func.func @transform_14(%arg0: i32) -> (i32, i32) {
    %c0_i32 = arith.constant 0 : i32
    %c0_i32_0 = arith.constant 0 : i32
    %c0_i32_1 = arith.constant 0 : i32
    return %c0_i32, %c0_i32_0 : i32, i32
  }
  func.func @transform_15(%arg0: i32) -> (i32, i32) {
    %c0_i32 = arith.constant 0 : i32
    %c0_i32_0 = arith.constant 0 : i32
    %c0_i32_1 = arith.constant 0 : i32
    return %c0_i32, %c0_i32_0 : i32, i32
  }
  func.func @transform_16(%arg0: i32) -> (i32, i32) {
    %c0_i32 = arith.constant 0 : i32
    %c0_i32_0 = arith.constant 0 : i32
    %c0_i32_1 = arith.constant 0 : i32
    return %c0_i32, %c0_i32_0 : i32, i32
  }
  func.func @transform_17(%arg0: i32) -> (i32, i32) {
    %c0_i32 = arith.constant 0 : i32
    %c0_i32_0 = arith.constant 0 : i32
    %c0_i32_1 = arith.constant 0 : i32
    return %c0_i32, %c0_i32_0 : i32, i32
  }
  func.func @transform_18(%arg0: i32) -> (i32, i32) {
    %c0_i32 = arith.constant 0 : i32
    %c0_i32_0 = arith.constant 0 : i32
    %c0_i32_1 = arith.constant 0 : i32
    return %c0_i32, %c0_i32_0 : i32, i32
  }
  func.func @transform_19(%arg0: i32) -> (i32, i32) {
    %c0_i32 = arith.constant 0 : i32
    %c0_i32_0 = arith.constant 0 : i32
    %c0_i32_1 = arith.constant 0 : i32
    return %c0_i32, %c0_i32_0 : i32, i32
  }
  func.func @transform_20(%arg0: i32) -> (i32, i32) {
    %c0_i32 = arith.constant 0 : i32
    %c0_i32_0 = arith.constant 0 : i32
    %c0_i32_1 = arith.constant 0 : i32
    return %c0_i32, %c0_i32_0 : i32, i32
  }
  func.func @transform_21(%arg0: i32) -> (i32, i32) {
    %c0_i32 = arith.constant 0 : i32
    %c0_i32_0 = arith.constant 0 : i32
    %c0_i32_1 = arith.constant 0 : i32
    return %c0_i32, %c0_i32_0 : i32, i32
  }
  func.func @transform_22(%arg0: i32) -> (i32, i32) {
    %c0_i32 = arith.constant 0 : i32
    %c0_i32_0 = arith.constant 0 : i32
    %c0_i32_1 = arith.constant 0 : i32
    return %c0_i32, %c0_i32_0 : i32, i32
  }
  func.func @transform_23(%arg0: i32) -> (i32, i32) {
    %c0_i32 = arith.constant 0 : i32
    %c0_i32_0 = arith.constant 0 : i32
    %c0_i32_1 = arith.constant 0 : i32
    return %c0_i32, %c0_i32_0 : i32, i32
  }
  func.func @transform_24(%arg0: i32) -> (i32, i32) {
    %c0_i32 = arith.constant 0 : i32
    %c0_i32_0 = arith.constant 0 : i32
    %c0_i32_1 = arith.constant 0 : i32
    return %c0_i32, %c0_i32_0 : i32, i32
  }
  func.func @transform_25(%arg0: i32) -> (i32, i32) {
    %c0_i32 = arith.constant 0 : i32
    %c0_i32_0 = arith.constant 0 : i32
    %c0_i32_1 = arith.constant 0 : i32
    return %c0_i32, %c0_i32_0 : i32, i32
  }
  func.func @transform_26(%arg0: i32) -> (i32, i32) {
    %c0_i32 = arith.constant 0 : i32
    %c0_i32_0 = arith.constant 0 : i32
    %c0_i32_1 = arith.constant 0 : i32
    return %c0_i32, %c0_i32_0 : i32, i32
  }
  func.func @transform_27(%arg0: i32) -> (i32, i32) {
    %c0_i32 = arith.constant 0 : i32
    %c0_i32_0 = arith.constant 0 : i32
    %c0_i32_1 = arith.constant 0 : i32
    return %c0_i32, %c0_i32_0 : i32, i32
  }
  func.func @transform_28(%arg0: i32) -> (i32, i32) {
    %c0_i32 = arith.constant 0 : i32
    %c0_i32_0 = arith.constant 0 : i32
    %c0_i32_1 = arith.constant 0 : i32
    return %c0_i32, %c0_i32_0 : i32, i32
  }
  func.func @transform_29(%arg0: i32) -> (i32, i32) {
    %c0_i32 = arith.constant 0 : i32
    %c0_i32_0 = arith.constant 0 : i32
    %c0_i32_1 = arith.constant 0 : i32
    return %c0_i32, %c0_i32_0 : i32, i32
  }
  func.func @transform_30(%arg0: i32) -> (i32, i32, i32) {
    %c0_i32 = arith.constant 0 : i32
    %c0_i32_0 = arith.constant 0 : i32
    %c0_i32_1 = arith.constant 0 : i32
    return %arg0, %c0_i32, %c0_i32_0 : i32, i32, i32
  }
  func.func @transform_31(%arg0: i32) -> (i32, i32, i32) {
    %c0_i32 = arith.constant 0 : i32
    %c0_i32_0 = arith.constant 0 : i32
    %c0_i32_1 = arith.constant 0 : i32
    return %arg0, %c0_i32, %c0_i32_0 : i32, i32, i32
  }
}

</mosaic_0001>

<llo_original>
// kernel: tpu_custom_call.1
$region0: #{tpu_custom_call.1}
  #allocation0 [shape = 'u32[]', space=smem, size = 0x4, offset = 0x4, fixed_abs, tag = 'smem constant byte address 0x4 - core index']
  #allocation1 [shape = 'u32[72,128]{1,0:T(1,128)}', space=vmem, size = 0x9000, scoped, tag = 'internal scratch']
  %s0 = inlined_call_operand.smem [shape: u32[32], index: -1, kind: input, shape index: {}]
  %s1 = sld [smem:[%s0]]
  %s2 = scalar_lea.smem %s0, 1
  %s3 = sld [smem:[%s2]]
  %s4 = scalar_lea.smem %s0, 2
  %s5 = sld [smem:[%s4]]
  %s6 = scalar_lea.smem %s0, 3
  %s7 = sld [smem:[%s6]]
  %s8 = scalar_lea.smem %s0, 4
  %s9 = sld [smem:[%s8]]
  %s10 = scalar_lea.smem %s0, 5
  %s11 = sld [smem:[%s10]]
  %s12 = scalar_lea.smem %s0, 6
  %s13 = sld [smem:[%s12]]
  %s14 = scalar_lea.smem %s0, 7
  %s15 = sld [smem:[%s14]]
  %s16 = scalar_lea.smem %s0, 8
  %s17 = sld [smem:[%s16]]
  %s18 = scalar_lea.smem %s0, 9
  %s19 = sld [smem:[%s18]]
  %s20 = scalar_lea.smem %s0, 10
  %s21 = sld [smem:[%s20]]
  %s22 = scalar_lea.smem %s0, 11
  %s23 = sld [smem:[%s22]]
  %s24 = scalar_lea.smem %s0, 12
  %s25 = sld [smem:[%s24]]
  %s26 = scalar_lea.smem %s0, 13
  %s27 = sld [smem:[%s26]]
  %s28 = scalar_lea.smem %s0, 14
  %s29 = sld [smem:[%s28]]
  %s30 = scalar_lea.smem %s0, 15
  %s31 = sld [smem:[%s30]]
  %s32 = scalar_lea.smem %s0, 16
  %s33 = sld [smem:[%s32]]
  %s34 = scalar_lea.smem %s0, 17
  %s35 = sld [smem:[%s34]]
  %s36 = scalar_lea.smem %s0, 18
  %s37 = sld [smem:[%s36]]
  %s38 = scalar_lea.smem %s0, 19
  %s39 = sld [smem:[%s38]]
  %s40 = scalar_lea.smem %s0, 20
  %s41 = sld [smem:[%s40]]
  %s42 = scalar_lea.smem %s0, 21
  %s43 = sld [smem:[%s42]]
  %s44 = scalar_lea.smem %s0, 22
  %s45 = sld [smem:[%s44]]
  %s46 = scalar_lea.smem %s0, 23
  %s47 = sld [smem:[%s46]]
  %s48 = scalar_lea.smem %s0, 24
  %s49 = sld [smem:[%s48]]
  %s50 = scalar_lea.smem %s0, 25
  %s51 = sld [smem:[%s50]]
  %s52 = scalar_lea.smem %s0, 26
  %s53 = sld [smem:[%s52]]
  %s54 = scalar_lea.smem %s0, 27
  %s55 = sld [smem:[%s54]]
  %s56 = scalar_lea.smem %s0, 28
  %s57 = sld [smem:[%s56]]
  %s58 = scalar_lea.smem %s0, 29
  %s59 = sld [smem:[%s58]]
  %s60 = scalar_lea.smem %s0, 30
  %s61 = sld [smem:[%s60]]
  %s62 = scalar_lea.smem %s0, 31
  %s63 = sld [smem:[%s62]]
  %s64 = sld [smem:[#allocation0]]
  $region157: #{tpu_custom_call.1} parent=0
    _
  %s66 = ssub.s32 1, %s64
  %s67 = scalar_select 0, %s66, %s64
  $region1: #{tpu_custom_call.1} parent=0
    #allocation2 [shape = 'u8[40960]{0}', space=vmem, size = 0xa000, scoped, tag = 'output window, operand 0']
    #allocation3 [shape = 's32[2]{0}', space=sflag, size = 0x8, scoped, tag = 'scoped memory for tpu_custom_call.1']
    %68 = vsyncpa [#allocation3], 0
    %s69 = scalar_lea.sflag [#allocation3], 1
    %70 = vsyncpa %s69, 0
    loop: start=0, step=1, limit=4
    $region2: #{tpu_custom_call.1} parent=1 // loop_pre_header
      _
    $region3: #{tpu_custom_call.1} parent=1 // loop_header
      %s72 = sphi 0, %s76
      %p73 = scmp.ge.s32.totalorder %s72, 4
      %s82 = sphi 0, %s84
      %s85 = sphi 0, %s82
      %s86 = sphi 0, %s85
      %s102 = sphi 0, %s86
      %s106 = sphi 0, %s106
      %s108 = sphi 0, %s106
      %s109 = sphi 0, %s108
      %s123 = sphi 0, %s109
      %s127 = sphi 0, %s127
      %s129 = sphi 0, %s127
      %s130 = sphi 0, %s129
      %s144 = sphi 0, %s130
      %s148 = sphi 0, %s148
      %s150 = sphi 0, %s148
      %s151 = sphi 0, %s150
      %s165 = sphi 0, %s151
      %s169 = sphi 0, %s169
      %s171 = sphi 0, %s169
      %s172 = sphi 0, %s171
      %s186 = sphi 0, %s172
      %s190 = sphi 0, %s190
      %s192 = sphi 0, %s190
      %s193 = sphi 0, %s192
      %s207 = sphi 0, %s193
      %s211 = sphi 0, %s211
      %s213 = sphi 0, %s211
      %s214 = sphi 0, %s213
      %s228 = sphi 0, %s214
      %s232 = sphi 0, %s232
      %s234 = sphi 0, %s232
      %s235 = sphi 0, %s234
      %s249 = sphi 0, %s235
      %s253 = sphi 0, %s253
      %s255 = sphi 0, %s253
      %s256 = sphi 0, %s255
      %s270 = sphi 0, %s256
      %s274 = sphi 0, %s274
      %s276 = sphi 0, %s274
      %s277 = sphi 0, %s276
      %s291 = sphi 0, %s277
      %s295 = sphi 0, %s295
      %s297 = sphi 0, %s295
      %s298 = sphi 0, %s297
      %s312 = sphi 0, %s298
      %s316 = sphi 0, %s316
      %s318 = sphi 0, %s316
      %s319 = sphi 0, %s318
      %s333 = sphi 0, %s319
      %s337 = sphi 0, %s337
      %s339 = sphi 0, %s337
      %s340 = sphi 0, %s339
      %s354 = sphi 0, %s340
      %s358 = sphi 0, %s358
      %s360 = sphi 0, %s358
      %s361 = sphi 0, %s360
      %s375 = sphi 0, %s361
      %s379 = sphi 0, %s379
      %s381 = sphi 0, %s379
      %s382 = sphi 0, %s381
      %s396 = sphi 0, %s382
      %s400 = sphi 0, %s400
      %s402 = sphi 0, %s400
      %s403 = sphi 0, %s402
      %s417 = sphi 0, %s403
      %s421 = sphi 0, %s421
      %s423 = sphi 0, %s421
      %s424 = sphi 0, %s423
      %s438 = sphi 0, %s424
      %s442 = sphi 0, %s442
      %s444 = sphi 0, %s442
      %s445 = sphi 0, %s444
      %s459 = sphi 0, %s445
      %s463 = sphi 0, %s463
      %s465 = sphi 0, %s463
      %s466 = sphi 0, %s465
      %s480 = sphi 0, %s466
      %s484 = sphi 0, %s484
      %s486 = sphi 0, %s484
      %s487 = sphi 0, %s486
      %s501 = sphi 0, %s487
      %s505 = sphi 0, %s505
      %s507 = sphi 0, %s505
      %s508 = sphi 0, %s507
      %s522 = sphi 0, %s508
      %s526 = sphi 0, %s526
      %s528 = sphi 0, %s526
      %s529 = sphi 0, %s528
      %s543 = sphi 0, %s529
      %s547 = sphi 0, %s547
      %s549 = sphi 0, %s547
      %s550 = sphi 0, %s549
      %s564 = sphi 0, %s550
      %s568 = sphi 0, %s568
      %s570 = sphi 0, %s568
      %s571 = sphi 0, %s570
      %s585 = sphi 0, %s571
      %s589 = sphi 0, %s589
      %s591 = sphi 0, %s589
      %s592 = sphi 0, %s591
      %s606 = sphi 0, %s592
      %s610 = sphi 0, %s610
      %s612 = sphi 0, %s610
      %s613 = sphi 0, %s612
      %s627 = sphi 0, %s613
      %s631 = sphi 0, %s631
      %s633 = sphi 0, %s631
      %s634 = sphi 0, %s633
      %s648 = sphi 0, %s634
      %s652 = sphi 0, %s652
      %s654 = sphi 0, %s652
      %s655 = sphi 0, %s654
      %s669 = sphi 0, %s655
      %s673 = sphi 0, %s673
      %s675 = sphi 0, %s673
      %s676 = sphi 0, %s675
      %s690 = sphi 0, %s676
      %s694 = sphi 0, %s694
      %s696 = sphi 0, %s694
      %s697 = sphi 0, %s696
      %s711 = sphi 0, %s697
      %s717 = sphi 0, %s719
      %s720 = sphi 0, %s717
      %s721 = sphi 0, %s720
      %s737 = sphi 0, %s721
      %s743 = sphi 0, %s745
      %s746 = sphi 0, %s743
      %s747 = sphi 0, %s746
      %s763 = sphi 0, %s747
    $region4: #{tpu_custom_call.1} parent=1 // loop_header_branch
      %75 = sbr.rel (%p73) target = $region8
    $region5: #{tpu_custom_call.1} parent=1 // loop_body
      %s77 = ssub.s32 %s72, 1
      %s78 = ssub.s32 %s72, 2
      %s79 = sadd.s32 %s72, 1
      %s80 = ssub.s32 %s72, %s79
      %p81 = scmp.eq.s32.totalorder %s80, 0
      %s83 = sadd.s32 %s82, 1
      %s84 = scalar_select %p81, %s82, %s83
      %p87 = pneg %p81
      %p88 = scmp.eq.s32.totalorder %s72, 1
      %p89 = por %p87, %p88
      %p90 = scmp.ne.s32.totalorder %s82, %s85
      %p91 = scmp.eq.s32.totalorder %s72, 0
      %p92 = por %p90, %p91
      %p93 = scmp.ne.s32.totalorder %s82, %s85
      %p94 = scmp.eq.s32.totalorder %s77, 1
      %p95 = por %p93, %p94
      %p96 = scmp.ne.s32.totalorder %s85, %s86
      %p97 = scmp.eq.s32.totalorder %s77, 0
      %p98 = por %p96, %p97
      %p99 = scmp.ne.s32.totalorder %s85, %s86
      %p100 = scmp.eq.s32.totalorder %s78, 1
      %p101 = por %p99, %p100
      %p103 = scmp.ne.s32.totalorder %s86, %s102
      %p104 = scmp.eq.s32.totalorder %s78, 0
      %p105 = por %p103, %p104
      %s107 = sadd.s32 %s106, 1
      %p110 = scmp.eq.s32.totalorder %s72, 1
      %p111 = scmp.ne.s32.totalorder %s106, %s108
      %p112 = scmp.eq.s32.totalorder %s72, 0
      %p113 = por %p111, %p112
      %p114 = scmp.ne.s32.totalorder %s106, %s108
      %p115 = scmp.eq.s32.totalorder %s77, 1
      %p116 = por %p114, %p115
      %p117 = scmp.ne.s32.totalorder %s108, %s109
      %p118 = scmp.eq.s32.totalorder %s77, 0
      %p119 = por %p117, %p118
      %p120 = scmp.ne.s32.totalorder %s108, %s109
      %p121 = scmp.eq.s32.totalorder %s78, 1
      %p122 = por %p120, %p121
      %p124 = scmp.ne.s32.totalorder %s109, %s123
      %p125 = scmp.eq.s32.totalorder %s78, 0
      %p126 = por %p124, %p125
      %s128 = sadd.s32 %s127, 1
      %p131 = scmp.eq.s32.totalorder %s72, 1
      %p132 = scmp.ne.s32.totalorder %s127, %s129
      %p133 = scmp.eq.s32.totalorder %s72, 0
      %p134 = por %p132, %p133
      %p135 = scmp.ne.s32.totalorder %s127, %s129
      %p136 = scmp.eq.s32.totalorder %s77, 1
      %p137 = por %p135, %p136
      %p138 = scmp.ne.s32.totalorder %s129, %s130
      %p139 = scmp.eq.s32.totalorder %s77, 0
      %p140 = por %p138, %p139
      %p141 = scmp.ne.s32.totalorder %s129, %s130
      %p142 = scmp.eq.s32.totalorder %s78, 1
      %p143 = por %p141, %p142
      %p145 = scmp.ne.s32.totalorder %s130, %s144
      %p146 = scmp.eq.s32.totalorder %s78, 0
      %p147 = por %p145, %p146
      %s149 = sadd.s32 %s148, 1
      %p152 = scmp.eq.s32.totalorder %s72, 1
      %p153 = scmp.ne.s32.totalorder %s148, %s150
      %p154 = scmp.eq.s32.totalorder %s72, 0
      %p155 = por %p153, %p154
      %p156 = scmp.ne.s32.totalorder %s148, %s150
      %p157 = scmp.eq.s32.totalorder %s77, 1
      %p158 = por %p156, %p157
      %p159 = scmp.ne.s32.totalorder %s150, %s151
      %p160 = scmp.eq.s32.totalorder %s77, 0
      %p161 = por %p159, %p160
      %p162 = scmp.ne.s32.totalorder %s150, %s151
      %p163 = scmp.eq.s32.totalorder %s78, 1
      %p164 = por %p162, %p163
      %p166 = scmp.ne.s32.totalorder %s151, %s165
      %p167 = scmp.eq.s32.totalorder %s78, 0
      %p168 = por %p166, %p167
      %s170 = sadd.s32 %s169, 1
      %p173 = scmp.eq.s32.totalorder %s72, 1
      %p174 = scmp.ne.s32.totalorder %s169, %s171
      %p175 = scmp.eq.s32.totalorder %s72, 0
      %p176 = por %p174, %p175
      %p177 = scmp.ne.s32.totalorder %s169, %s171
      %p178 = scmp.eq.s32.totalorder %s77, 1
      %p179 = por %p177, %p178
      %p180 = scmp.ne.s32.totalorder %s171, %s172
      %p181 = scmp.eq.s32.totalorder %s77, 0
      %p182 = por %p180, %p181
      %p183 = scmp.ne.s32.totalorder %s171, %s172
      %p184 = scmp.eq.s32.totalorder %s78, 1
      %p185 = por %p183, %p184
      %p187 = scmp.ne.s32.totalorder %s172, %s186
      %p188 = scmp.eq.s32.totalorder %s78, 0
      %p189 = por %p187, %p188
      %s191 = sadd.s32 %s190, 1
      %p194 = scmp.eq.s32.totalorder %s72, 1
      %p195 = scmp.ne.s32.totalorder %s190, %s192
      %p196 = scmp.eq.s32.totalorder %s72, 0
      %p197 = por %p195, %p196
      %p198 = scmp.ne.s32.totalorder %s190, %s192
      %p199 = scmp.eq.s32.totalorder %s77, 1
      %p200 = por %p198, %p199
      %p201 = scmp.ne.s32.totalorder %s192, %s193
      %p202 = scmp.eq.s32.totalorder %s77, 0
      %p203 = por %p201, %p202
      %p204 = scmp.ne.s32.totalorder %s192, %s193
      %p205 = scmp.eq.s32.totalorder %s78, 1
      %p206 = por %p204, %p205
      %p208 = scmp.ne.s32.totalorder %s193, %s207
      %p209 = scmp.eq.s32.totalorder %s78, 0
      %p210 = por %p208, %p209
      %s212 = sadd.s32 %s211, 1
      %p215 = scmp.eq.s32.totalorder %s72, 1
      %p216 = scmp.ne.s32.totalorder %s211, %s213
      %p217 = scmp.eq.s32.totalorder %s72, 0
      %p218 = por %p216, %p217
      %p219 = scmp.ne.s32.totalorder %s211, %s213
      %p220 = scmp.eq.s32.totalorder %s77, 1
      %p221 = por %p219, %p220
      %p222 = scmp.ne.s32.totalorder %s213, %s214
      %p223 = scmp.eq.s32.totalorder %s77, 0
      %p224 = por %p222, %p223
      %p225 = scmp.ne.s32.totalorder %s213, %s214
      %p226 = scmp.eq.s32.totalorder %s78, 1
      %p227 = por %p225, %p226
      %p229 = scmp.ne.s32.totalorder %s214, %s228
      %p230 = scmp.eq.s32.totalorder %s78, 0
      %p231 = por %p229, %p230
      %s233 = sadd.s32 %s232, 1
      %p236 = scmp.eq.s32.totalorder %s72, 1
      %p237 = scmp.ne.s32.totalorder %s232, %s234
      %p238 = scmp.eq.s32.totalorder %s72, 0
      %p239 = por %p237, %p238
      %p240 = scmp.ne.s32.totalorder %s232, %s234
      %p241 = scmp.eq.s32.totalorder %s77, 1
      %p242 = por %p240, %p241
      %p243 = scmp.ne.s32.totalorder %s234, %s235
      %p244 = scmp.eq.s32.totalorder %s77, 0
      %p245 = por %p243, %p244
      %p246 = scmp.ne.s32.totalorder %s234, %s235
      %p247 = scmp.eq.s32.totalorder %s78, 1
      %p248 = por %p246, %p247
      %p250 = scmp.ne.s32.totalorder %s235, %s249
      %p251 = scmp.eq.s32.totalorder %s78, 0
      %p252 = por %p250, %p251
      %s254 = sadd.s32 %s253, 1
      %p257 = scmp.eq.s32.totalorder %s72, 1
      %p258 = scmp.ne.s32.totalorder %s253, %s255
      %p259 = scmp.eq.s32.totalorder %s72, 0
      %p260 = por %p258, %p259
      %p261 = scmp.ne.s32.totalorder %s253, %s255
      %p262 = scmp.eq.s32.totalorder %s77, 1
      %p263 = por %p261, %p262
      %p264 = scmp.ne.s32.totalorder %s255, %s256
      %p265 = scmp.eq.s32.totalorder %s77, 0
      %p266 = por %p264, %p265
      %p267 = scmp.ne.s32.totalorder %s255, %s256
      %p268 = scmp.eq.s32.totalorder %s78, 1
      %p269 = por %p267, %p268
      %p271 = scmp.ne.s32.totalorder %s256, %s270
      %p272 = scmp.eq.s32.totalorder %s78, 0
      %p273 = por %p271, %p272
      %s275 = sadd.s32 %s274, 1
      %p278 = scmp.eq.s32.totalorder %s72, 1
      %p279 = scmp.ne.s32.totalorder %s274, %s276
      %p280 = scmp.eq.s32.totalorder %s72, 0
      %p281 = por %p279, %p280
      %p282 = scmp.ne.s32.totalorder %s274, %s276
      %p283 = scmp.eq.s32.totalorder %s77, 1
      %p284 = por %p282, %p283
      %p285 = scmp.ne.s32.totalorder %s276, %s277
      %p286 = scmp.eq.s32.totalorder %s77, 0
      %p287 = por %p285, %p286
      %p288 = scmp.ne.s32.totalorder %s276, %s277
      %p289 = scmp.eq.s32.totalorder %s78, 1
      %p290 = por %p288, %p289
      %p292 = scmp.ne.s32.totalorder %s277, %s291
      %p293 = scmp.eq.s32.totalorder %s78, 0
      %p294 = por %p292, %p293
      %s296 = sadd.s32 %s295, 1
      %p299 = scmp.eq.s32.totalorder %s72, 1
      %p300 = scmp.ne.s32.totalorder %s295, %s297
      %p301 = scmp.eq.s32.totalorder %s72, 0
      %p302 = por %p300, %p301
      %p303 = scmp.ne.s32.totalorder %s295, %s297
      %p304 = scmp.eq.s32.totalorder %s77, 1
      %p305 = por %p303, %p304
      %p306 = scmp.ne.s32.totalorder %s297, %s298
      %p307 = scmp.eq.s32.totalorder %s77, 0
      %p308 = por %p306, %p307
      %p309 = scmp.ne.s32.totalorder %s297, %s298
      %p310 = scmp.eq.s32.totalorder %s78, 1
      %p311 = por %p309, %p310
      %p313 = scmp.ne.s32.totalorder %s298, %s312
      %p314 = scmp.eq.s32.totalorder %s78, 0
      %p315 = por %p313, %p314
      %s317 = sadd.s32 %s316, 1
      %p320 = scmp.eq.s32.totalorder %s72, 1
      %p321 = scmp.ne.s32.totalorder %s316, %s318
      %p322 = scmp.eq.s32.totalorder %s72, 0
      %p323 = por %p321, %p322
      %p324 = scmp.ne.s32.totalorder %s316, %s318
      %p325 = scmp.eq.s32.totalorder %s77, 1
      %p326 = por %p324, %p325
      %p327 = scmp.ne.s32.totalorder %s318, %s319
      %p328 = scmp.eq.s32.totalorder %s77, 0
      %p329 = por %p327, %p328
      %p330 = scmp.ne.s32.totalorder %s318, %s319
      %p331 = scmp.eq.s32.totalorder %s78, 1
      %p332 = por %p330, %p331
      %p334 = scmp.ne.s32.totalorder %s319, %s333
      %p335 = scmp.eq.s32.totalorder %s78, 0
      %p336 = por %p334, %p335
      %s338 = sadd.s32 %s337, 1
      %p341 = scmp.eq.s32.totalorder %s72, 1
      %p342 = scmp.ne.s32.totalorder %s337, %s339
      %p343 = scmp.eq.s32.totalorder %s72, 0
      %p344 = por %p342, %p343
      %p345 = scmp.ne.s32.totalorder %s337, %s339
      %p346 = scmp.eq.s32.totalorder %s77, 1
      %p347 = por %p345, %p346
      %p348 = scmp.ne.s32.totalorder %s339, %s340
      %p349 = scmp.eq.s32.totalorder %s77, 0
      %p350 = por %p348, %p349
      %p351 = scmp.ne.s32.totalorder %s339, %s340
      %p352 = scmp.eq.s32.totalorder %s78, 1
      %p353 = por %p351, %p352
      %p355 = scmp.ne.s32.totalorder %s340, %s354
      %p356 = scmp.eq.s32.totalorder %s78, 0
      %p357 = por %p355, %p356
      %s359 = sadd.s32 %s358, 1
      %p362 = scmp.eq.s32.totalorder %s72, 1
      %p363 = scmp.ne.s32.totalorder %s358, %s360
      %p364 = scmp.eq.s32.totalorder %s72, 0
      %p365 = por %p363, %p364
      %p366 = scmp.ne.s32.totalorder %s358, %s360
      %p367 = scmp.eq.s32.totalorder %s77, 1
      %p368 = por %p366, %p367
      %p369 = scmp.ne.s32.totalorder %s360, %s361
      %p370 = scmp.eq.s32.totalorder %s77, 0
      %p371 = por %p369, %p370
      %p372 = scmp.ne.s32.totalorder %s360, %s361
      %p373 = scmp.eq.s32.totalorder %s78, 1
      %p374 = por %p372, %p373
      %p376 = scmp.ne.s32.totalorder %s361, %s375
      %p377 = scmp.eq.s32.totalorder %s78, 0
      %p378 = por %p376, %p377
      %s380 = sadd.s32 %s379, 1
      %p383 = scmp.eq.s32.totalorder %s72, 1
      %p384 = scmp.ne.s32.totalorder %s379, %s381
      %p385 = scmp.eq.s32.totalorder %s72, 0
      %p386 = por %p384, %p385
      %p387 = scmp.ne.s32.totalorder %s379, %s381
      %p388 = scmp.eq.s32.totalorder %s77, 1
      %p389 = por %p387, %p388
      %p390 = scmp.ne.s32.totalorder %s381, %s382
      %p391 = scmp.eq.s32.totalorder %s77, 0
      %p392 = por %p390, %p391
      %p393 = scmp.ne.s32.totalorder %s381, %s382
      %p394 = scmp.eq.s32.totalorder %s78, 1
      %p395 = por %p393, %p394
      %p397 = scmp.ne.s32.totalorder %s382, %s396
      %p398 = scmp.eq.s32.totalorder %s78, 0
      %p399 = por %p397, %p398
      %s401 = sadd.s32 %s400, 1
      %p404 = scmp.eq.s32.totalorder %s72, 1
      %p405 = scmp.ne.s32.totalorder %s400, %s402
      %p406 = scmp.eq.s32.totalorder %s72, 0
      %p407 = por %p405, %p406
      %p408 = scmp.ne.s32.totalorder %s400, %s402
      %p409 = scmp.eq.s32.totalorder %s77, 1
      %p410 = por %p408, %p409
      %p411 = scmp.ne.s32.totalorder %s402, %s403
      %p412 = scmp.eq.s32.totalorder %s77, 0
      %p413 = por %p411, %p412
      %p414 = scmp.ne.s32.totalorder %s402, %s403
      %p415 = scmp.eq.s32.totalorder %s78, 1
      %p416 = por %p414, %p415
      %p418 = scmp.ne.s32.totalorder %s403, %s417
      %p419 = scmp.eq.s32.totalorder %s78, 0
      %p420 = por %p418, %p419
      %s422 = sadd.s32 %s421, 1
      %p425 = scmp.eq.s32.totalorder %s72, 1
      %p426 = scmp.ne.s32.totalorder %s421, %s423
      %p427 = scmp.eq.s32.totalorder %s72, 0
      %p428 = por %p426, %p427
      %p429 = scmp.ne.s32.totalorder %s421, %s423
      %p430 = scmp.eq.s32.totalorder %s77, 1
      %p431 = por %p429, %p430
      %p432 = scmp.ne.s32.totalorder %s423, %s424
      %p433 = scmp.eq.s32.totalorder %s77, 0
      %p434 = por %p432, %p433
      %p435 = scmp.ne.s32.totalorder %s423, %s424
      %p436 = scmp.eq.s32.totalorder %s78, 1
      %p437 = por %p435, %p436
      %p439 = scmp.ne.s32.totalorder %s424, %s438
      %p440 = scmp.eq.s32.totalorder %s78, 0
      %p441 = por %p439, %p440
      %s443 = sadd.s32 %s442, 1
      %p446 = scmp.eq.s32.totalorder %s72, 1
      %p447 = scmp.ne.s32.totalorder %s442, %s444
      %p448 = scmp.eq.s32.totalorder %s72, 0
      %p449 = por %p447, %p448
      %p450 = scmp.ne.s32.totalorder %s442, %s444
      %p451 = scmp.eq.s32.totalorder %s77, 1
      %p452 = por %p450, %p451
      %p453 = scmp.ne.s32.totalorder %s444, %s445
      %p454 = scmp.eq.s32.totalorder %s77, 0
      %p455 = por %p453, %p454
      %p456 = scmp.ne.s32.totalorder %s444, %s445
      %p457 = scmp.eq.s32.totalorder %s78, 1
      %p458 = por %p456, %p457
      %p460 = scmp.ne.s32.totalorder %s445, %s459
      %p461 = scmp.eq.s32.totalorder %s78, 0
      %p462 = por %p460, %p461
      %s464 = sadd.s32 %s463, 1
      %p467 = scmp.eq.s32.totalorder %s72, 1
      %p468 = scmp.ne.s32.totalorder %s463, %s465
      %p469 = scmp.eq.s32.totalorder %s72, 0
      %p470 = por %p468, %p469
      %p471 = scmp.ne.s32.totalorder %s463, %s465
      %p472 = scmp.eq.s32.totalorder %s77, 1
      %p473 = por %p471, %p472
      %p474 = scmp.ne.s32.totalorder %s465, %s466
      %p475 = scmp.eq.s32.totalorder %s77, 0
      %p476 = por %p474, %p475
      %p477 = scmp.ne.s32.totalorder %s465, %s466
      %p478 = scmp.eq.s32.totalorder %s78, 1
      %p479 = por %p477, %p478
      %p481 = scmp.ne.s32.totalorder %s466, %s480
      %p482 = scmp.eq.s32.totalorder %s78, 0
      %p483 = por %p481, %p482
      %s485 = sadd.s32 %s484, 1
      %p488 = scmp.eq.s32.totalorder %s72, 1
      %p489 = scmp.ne.s32.totalorder %s484, %s486
      %p490 = scmp.eq.s32.totalorder %s72, 0
      %p491 = por %p489, %p490
      %p492 = scmp.ne.s32.totalorder %s484, %s486
      %p493 = scmp.eq.s32.totalorder %s77, 1
      %p494 = por %p492, %p493
      %p495 = scmp.ne.s32.totalorder %s486, %s487
      %p496 = scmp.eq.s32.totalorder %s77, 0
      %p497 = por %p495, %p496
      %p498 = scmp.ne.s32.totalorder %s486, %s487
      %p499 = scmp.eq.s32.totalorder %s78, 1
      %p500 = por %p498, %p499
      %p502 = scmp.ne.s32.totalorder %s487, %s501
      %p503 = scmp.eq.s32.totalorder %s78, 0
      %p504 = por %p502, %p503
      %s506 = sadd.s32 %s505, 1
      %p509 = scmp.eq.s32.totalorder %s72, 1
      %p510 = scmp.ne.s32.totalorder %s505, %s507
      %p511 = scmp.eq.s32.totalorder %s72, 0
      %p512 = por %p510, %p511
      %p513 = scmp.ne.s32.totalorder %s505, %s507
      %p514 = scmp.eq.s32.totalorder %s77, 1
      %p515 = por %p513, %p514
      %p516 = scmp.ne.s32.totalorder %s507, %s508
      %p517 = scmp.eq.s32.totalorder %s77, 0
      %p518 = por %p516, %p517
      %p519 = scmp.ne.s32.totalorder %s507, %s508
      %p520 = scmp.eq.s32.totalorder %s78, 1
      %p521 = por %p519, %p520
      %p523 = scmp.ne.s32.totalorder %s508, %s522
      %p524 = scmp.eq.s32.totalorder %s78, 0
      %p525 = por %p523, %p524
      %s527 = sadd.s32 %s526, 1
      %p530 = scmp.eq.s32.totalorder %s72, 1
      %p531 = scmp.ne.s32.totalorder %s526, %s528
      %p532 = scmp.eq.s32.totalorder %s72, 0
      %p533 = por %p531, %p532
      %p534 = scmp.ne.s32.totalorder %s526, %s528
      %p535 = scmp.eq.s32.totalorder %s77, 1
      %p536 = por %p534, %p535
      %p537 = scmp.ne.s32.totalorder %s528, %s529
      %p538 = scmp.eq.s32.totalorder %s77, 0
      %p539 = por %p537, %p538
      %p540 = scmp.ne.s32.totalorder %s528, %s529
      %p541 = scmp.eq.s32.totalorder %s78, 1
      %p542 = por %p540, %p541
      %p544 = scmp.ne.s32.totalorder %s529, %s543
      %p545 = scmp.eq.s32.totalorder %s78, 0
      %p546 = por %p544, %p545
      %s548 = sadd.s32 %s547, 1
      %p551 = scmp.eq.s32.totalorder %s72, 1
      %p552 = scmp.ne.s32.totalorder %s547, %s549
      %p553 = scmp.eq.s32.totalorder %s72, 0
      %p554 = por %p552, %p553
      %p555 = scmp.ne.s32.totalorder %s547, %s549
      %p556 = scmp.eq.s32.totalorder %s77, 1
      %p557 = por %p555, %p556
      %p558 = scmp.ne.s32.totalorder %s549, %s550
      %p559 = scmp.eq.s32.totalorder %s77, 0
      %p560 = por %p558, %p559
      %p561 = scmp.ne.s32.totalorder %s549, %s550
      %p562 = scmp.eq.s32.totalorder %s78, 1
      %p563 = por %p561, %p562
      %p565 = scmp.ne.s32.totalorder %s550, %s564
      %p566 = scmp.eq.s32.totalorder %s78, 0
      %p567 = por %p565, %p566
      %s569 = sadd.s32 %s568, 1
      %p572 = scmp.eq.s32.totalorder %s72, 1
      %p573 = scmp.ne.s32.totalorder %s568, %s570
      %p574 = scmp.eq.s32.totalorder %s72, 0
      %p575 = por %p573, %p574
      %p576 = scmp.ne.s32.totalorder %s568, %s570
      %p577 = scmp.eq.s32.totalorder %s77, 1
      %p578 = por %p576, %p577
      %p579 = scmp.ne.s32.totalorder %s570, %s571
      %p580 = scmp.eq.s32.totalorder %s77, 0
      %p581 = por %p579, %p580
      %p582 = scmp.ne.s32.totalorder %s570, %s571
      %p583 = scmp.eq.s32.totalorder %s78, 1
      %p584 = por %p582, %p583
      %p586 = scmp.ne.s32.totalorder %s571, %s585
      %p587 = scmp.eq.s32.totalorder %s78, 0
      %p588 = por %p586, %p587
      %s590 = sadd.s32 %s589, 1
      %p593 = scmp.eq.s32.totalorder %s72, 1
      %p594 = scmp.ne.s32.totalorder %s589, %s591
      %p595 = scmp.eq.s32.totalorder %s72, 0
      %p596 = por %p594, %p595
      %p597 = scmp.ne.s32.totalorder %s589, %s591
      %p598 = scmp.eq.s32.totalorder %s77, 1
      %p599 = por %p597, %p598
      %p600 = scmp.ne.s32.totalorder %s591, %s592
      %p601 = scmp.eq.s32.totalorder %s77, 0
      %p602 = por %p600, %p601
      %p603 = scmp.ne.s32.totalorder %s591, %s592
      %p604 = scmp.eq.s32.totalorder %s78, 1
      %p605 = por %p603, %p604
      %p607 = scmp.ne.s32.totalorder %s592, %s606
      %p608 = scmp.eq.s32.totalorder %s78, 0
      %p609 = por %p607, %p608
      %s611 = sadd.s32 %s610, 1
      %p614 = scmp.eq.s32.totalorder %s72, 1
      %p615 = scmp.ne.s32.totalorder %s610, %s612
      %p616 = scmp.eq.s32.totalorder %s72, 0
      %p617 = por %p615, %p616
      %p618 = scmp.ne.s32.totalorder %s610, %s612
      %p619 = scmp.eq.s32.totalorder %s77, 1
      %p620 = por %p618, %p619
      %p621 = scmp.ne.s32.totalorder %s612, %s613
      %p622 = scmp.eq.s32.totalorder %s77, 0
      %p623 = por %p621, %p622
      %p624 = scmp.ne.s32.totalorder %s612, %s613
      %p625 = scmp.eq.s32.totalorder %s78, 1
      %p626 = por %p624, %p625
      %p628 = scmp.ne.s32.totalorder %s613, %s627
      %p629 = scmp.eq.s32.totalorder %s78, 0
      %p630 = por %p628, %p629
      %s632 = sadd.s32 %s631, 1
      %p635 = scmp.eq.s32.totalorder %s72, 1
      %p636 = scmp.ne.s32.totalorder %s631, %s633
      %p637 = scmp.eq.s32.totalorder %s72, 0
      %p638 = por %p636, %p637
      %p639 = scmp.ne.s32.totalorder %s631, %s633
      %p640 = scmp.eq.s32.totalorder %s77, 1
      %p641 = por %p639, %p640
      %p642 = scmp.ne.s32.totalorder %s633, %s634
      %p643 = scmp.eq.s32.totalorder %s77, 0
      %p644 = por %p642, %p643
      %p645 = scmp.ne.s32.totalorder %s633, %s634
      %p646 = scmp.eq.s32.totalorder %s78, 1
      %p647 = por %p645, %p646
      %p649 = scmp.ne.s32.totalorder %s634, %s648
      %p650 = scmp.eq.s32.totalorder %s78, 0
      %p651 = por %p649, %p650
      %s653 = sadd.s32 %s652, 1
      %p656 = scmp.eq.s32.totalorder %s72, 1
      %p657 = scmp.ne.s32.totalorder %s652, %s654
      %p658 = scmp.eq.s32.totalorder %s72, 0
      %p659 = por %p657, %p658
      %p660 = scmp.ne.s32.totalorder %s652, %s654
      %p661 = scmp.eq.s32.totalorder %s77, 1
      %p662 = por %p660, %p661
      %p663 = scmp.ne.s32.totalorder %s654, %s655
      %p664 = scmp.eq.s32.totalorder %s77, 0
      %p665 = por %p663, %p664
      %p666 = scmp.ne.s32.totalorder %s654, %s655
      %p667 = scmp.eq.s32.totalorder %s78, 1
      %p668 = por %p666, %p667
      %p670 = scmp.ne.s32.totalorder %s655, %s669
      %p671 = scmp.eq.s32.totalorder %s78, 0
      %p672 = por %p670, %p671
      %s674 = sadd.s32 %s673, 1
      %p677 = scmp.eq.s32.totalorder %s72, 1
      %p678 = scmp.ne.s32.totalorder %s673, %s675
      %p679 = scmp.eq.s32.totalorder %s72, 0
      %p680 = por %p678, %p679
      %p681 = scmp.ne.s32.totalorder %s673, %s675
      %p682 = scmp.eq.s32.totalorder %s77, 1
      %p683 = por %p681, %p682
      %p684 = scmp.ne.s32.totalorder %s675, %s676
      %p685 = scmp.eq.s32.totalorder %s77, 0
      %p686 = por %p684, %p685
      %p687 = scmp.ne.s32.totalorder %s675, %s676
      %p688 = scmp.eq.s32.totalorder %s78, 1
      %p689 = por %p687, %p688
      %p691 = scmp.ne.s32.totalorder %s676, %s690
      %p692 = scmp.eq.s32.totalorder %s78, 0
      %p693 = por %p691, %p692
      %s695 = sadd.s32 %s694, 1
      %p698 = scmp.eq.s32.totalorder %s72, 1
      %p699 = scmp.ne.s32.totalorder %s694, %s696
      %p700 = scmp.eq.s32.totalorder %s72, 0
      %p701 = por %p699, %p700
      %p702 = scmp.ne.s32.totalorder %s694, %s696
      %p703 = scmp.eq.s32.totalorder %s77, 1
      %p704 = por %p702, %p703
      %p705 = scmp.ne.s32.totalorder %s696, %s697
      %p706 = scmp.eq.s32.totalorder %s77, 0
      %p707 = por %p705, %p706
      %p708 = scmp.ne.s32.totalorder %s696, %s697
      %p709 = scmp.eq.s32.totalorder %s78, 1
      %p710 = por %p708, %p709
      %p712 = scmp.ne.s32.totalorder %s697, %s711
      %p713 = scmp.eq.s32.totalorder %s78, 0
      %p714 = por %p712, %p713
      %s715 = ssub.s32 %s72, %s79
      %p716 = scmp.eq.s32.totalorder %s715, 0
      %s718 = sadd.s32 %s717, 1
      %s719 = scalar_select %p716, %s717, %s718
      %p722 = pneg %p716
      %p723 = scmp.eq.s32.totalorder %s72, 1
      %p724 = por %p722, %p723
      %p725 = scmp.ne.s32.totalorder %s717, %s720
      %p726 = scmp.eq.s32.totalorder %s72, 0
      %p727 = por %p725, %p726
      %p728 = scmp.ne.s32.totalorder %s717, %s720
      %p729 = scmp.eq.s32.totalorder %s77, 1
      %p730 = por %p728, %p729
      %p731 = scmp.ne.s32.totalorder %s720, %s721
      %p732 = scmp.eq.s32.totalorder %s77, 0
      %p733 = por %p731, %p732
      %p734 = scmp.ne.s32.totalorder %s720, %s721
      %p735 = scmp.eq.s32.totalorder %s78, 1
      %p736 = por %p734, %p735
      %p738 = scmp.ne.s32.totalorder %s721, %s737
      %p739 = scmp.eq.s32.totalorder %s78, 0
      %p740 = por %p738, %p739
      %s741 = ssub.s32 %s72, %s79
      %p742 = scmp.eq.s32.totalorder %s741, 0
      %s744 = sadd.s32 %s743, 1
      %s745 = scalar_select %p742, %s743, %s744
      %p748 = pneg %p742
      %p749 = scmp.eq.s32.totalorder %s72, 1
      %p750 = por %p748, %p749
      %p751 = scmp.ne.s32.totalorder %s743, %s746
      %p752 = scmp.eq.s32.totalorder %s72, 0
      %p753 = por %p751, %p752
      %p754 = scmp.ne.s32.totalorder %s743, %s746
      %p755 = scmp.eq.s32.totalorder %s77, 1
      %p756 = por %p754, %p755
      %p757 = scmp.ne.s32.totalorder %s746, %s747
      %p758 = scmp.eq.s32.totalorder %s77, 0
      %p759 = por %p757, %p758
      %p760 = scmp.ne.s32.totalorder %s746, %s747
      %p761 = scmp.eq.s32.totalorder %s78, 1
      %p762 = por %p760, %p761
      %p764 = scmp.ne.s32.totalorder %s747, %s763
      %p765 = scmp.eq.s32.totalorder %s78, 0
      %p766 = por %p764, %p765
      %p767 = scmp.le.s32.totalorder 1, %s72
      %p768 = scmp.lt.s32.totalorder %s72, 3
      %p769 = pnand %p767, %p768
      %p770 = pneg %p769
      // Predicated region
      $region9: #{tpu_custom_call.1} parent=5 // pred_check
        _
      $region10: #{tpu_custom_call.1} parent=5 // pred_check_branch
        %772 = sbr.rel (%p769) target = $region12
      $region11: #{tpu_custom_call.1} parent=5 // pred_region
        %s773 = ssub.s32 %s72, 1
        // Predicated region
        $region13: #{tpu_custom_call.1} parent=11 // pred_check
          %p774 = pneg %p119
        $region14: #{tpu_custom_call.1} parent=11 // pred_check_branch
          %776 = sbr.rel (%p774) target = $region16
        $region15: #{tpu_custom_call.1} parent=11 // pred_region
          _
        $region16: #{tpu_custom_call.1} parent=11 // pred_fallthru
          _
        // Predicated region
        $region17: #{tpu_custom_call.1} parent=11 // pred_check
          %p777 = pneg %p140
        $region18: #{tpu_custom_call.1} parent=11 // pred_check_branch
          %779 = sbr.rel (%p777) target = $region20
        $region19: #{tpu_custom_call.1} parent=11 // pred_region
          _
        $region20: #{tpu_custom_call.1} parent=11 // pred_fallthru
          _
        // Predicated region
        $region21: #{tpu_custom_call.1} parent=11 // pred_check
          %p780 = pneg %p161
        $region22: #{tpu_custom_call.1} parent=11 // pred_check_branch
          %782 = sbr.rel (%p780) target = $region24
        $region23: #{tpu_custom_call.1} parent=11 // pred_region
          _
        $region24: #{tpu_custom_call.1} parent=11 // pred_fallthru
          _
        // Predicated region
        $region25: #{tpu_custom_call.1} parent=11 // pred_check
          %p783 = pneg %p182
        $region26: #{tpu_custom_call.1} parent=11 // pred_check_branch
          %785 = sbr.rel (%p783) target = $region28
        $region27: #{tpu_custom_call.1} parent=11 // pred_region
          _
        $region28: #{tpu_custom_call.1} parent=11 // pred_fallthru
          _
        // Predicated region
        $region29: #{tpu_custom_call.1} parent=11 // pred_check
          %p786 = pneg %p203
        $region30: #{tpu_custom_call.1} parent=11 // pred_check_branch
          %788 = sbr.rel (%p786) target = $region32
        $region31: #{tpu_custom_call.1} parent=11 // pred_region
          _
        $region32: #{tpu_custom_call.1} parent=11 // pred_fallthru
          _
        // Predicated region
        $region33: #{tpu_custom_call.1} parent=11 // pred_check
          %p789 = pneg %p224
        $region34: #{tpu_custom_call.1} parent=11 // pred_check_branch
          %791 = sbr.rel (%p789) target = $region36
        $region35: #{tpu_custom_call.1} parent=11 // pred_region
          _
        $region36: #{tpu_custom_call.1} parent=11 // pred_fallthru
          _
        // Predicated region
        $region37: #{tpu_custom_call.1} parent=11 // pred_check
          %p792 = pneg %p245
        $region38: #{tpu_custom_call.1} parent=11 // pred_check_branch
          %794 = sbr.rel (%p792) target = $region40
        $region39: #{tpu_custom_call.1} parent=11 // pred_region
          _
        $region40: #{tpu_custom_call.1} parent=11 // pred_fallthru
          _
        // Predicated region
        $region41: #{tpu_custom_call.1} parent=11 // pred_check
          %p795 = pneg %p266
        $region42: #{tpu_custom_call.1} parent=11 // pred_check_branch
          %797 = sbr.rel (%p795) target = $region44
        $region43: #{tpu_custom_call.1} parent=11 // pred_region
          _
        $region44: #{tpu_custom_call.1} parent=11 // pred_fallthru
          _
        // Predicated region
        $region45: #{tpu_custom_call.1} parent=11 // pred_check
          %p798 = pneg %p287
        $region46: #{tpu_custom_call.1} parent=11 // pred_check_branch
          %800 = sbr.rel (%p798) target = $region48
        $region47: #{tpu_custom_call.1} parent=11 // pred_region
          _
        $region48: #{tpu_custom_call.1} parent=11 // pred_fallthru
          _
        // Predicated region
        $region49: #{tpu_custom_call.1} parent=11 // pred_check
          %p801 = pneg %p308
        $region50: #{tpu_custom_call.1} parent=11 // pred_check_branch
          %803 = sbr.rel (%p801) target = $region52
        $region51: #{tpu_custom_call.1} parent=11 // pred_region
          _
        $region52: #{tpu_custom_call.1} parent=11 // pred_fallthru
          _
        // Predicated region
        $region53: #{tpu_custom_call.1} parent=11 // pred_check
          %p804 = pneg %p329
        $region54: #{tpu_custom_call.1} parent=11 // pred_check_branch
          %806 = sbr.rel (%p804) target = $region56
        $region55: #{tpu_custom_call.1} parent=11 // pred_region
          _
        $region56: #{tpu_custom_call.1} parent=11 // pred_fallthru
          _
        // Predicated region
        $region57: #{tpu_custom_call.1} parent=11 // pred_check
          %p807 = pneg %p350
        $region58: #{tpu_custom_call.1} parent=11 // pred_check_branch
          %809 = sbr.rel (%p807) target = $region60
        $region59: #{tpu_custom_call.1} parent=11 // pred_region
          _
        $region60: #{tpu_custom_call.1} parent=11 // pred_fallthru
          _
        // Predicated region
        $region61: #{tpu_custom_call.1} parent=11 // pred_check
          %p810 = pneg %p371
        $region62: #{tpu_custom_call.1} parent=11 // pred_check_branch
          %812 = sbr.rel (%p810) target = $region64
        $region63: #{tpu_custom_call.1} parent=11 // pred_region
          _
        $region64: #{tpu_custom_call.1} parent=11 // pred_fallthru
          _
        // Predicated region
        $region65: #{tpu_custom_call.1} parent=11 // pred_check
          %p813 = pneg %p392
        $region66: #{tpu_custom_call.1} parent=11 // pred_check_branch
          %815 = sbr.rel (%p813) target = $region68
        $region67: #{tpu_custom_call.1} parent=11 // pred_region
          _
        $region68: #{tpu_custom_call.1} parent=11 // pred_fallthru
          _
        // Predicated region
        $region69: #{tpu_custom_call.1} parent=11 // pred_check
          %p816 = pneg %p413
        $region70: #{tpu_custom_call.1} parent=11 // pred_check_branch
          %818 = sbr.rel (%p816) target = $region72
        $region71: #{tpu_custom_call.1} parent=11 // pred_region
          _
        $region72: #{tpu_custom_call.1} parent=11 // pred_fallthru
          _
        // Predicated region
        $region73: #{tpu_custom_call.1} parent=11 // pred_check
          %p819 = pneg %p434
        $region74: #{tpu_custom_call.1} parent=11 // pred_check_branch
          %821 = sbr.rel (%p819) target = $region76
        $region75: #{tpu_custom_call.1} parent=11 // pred_region
          _
        $region76: #{tpu_custom_call.1} parent=11 // pred_fallthru
          _
        // Predicated region
        $region77: #{tpu_custom_call.1} parent=11 // pred_check
          %p822 = pneg %p455
        $region78: #{tpu_custom_call.1} parent=11 // pred_check_branch
          %824 = sbr.rel (%p822) target = $region80
        $region79: #{tpu_custom_call.1} parent=11 // pred_region
          _
        $region80: #{tpu_custom_call.1} parent=11 // pred_fallthru
          _
        // Predicated region
        $region81: #{tpu_custom_call.1} parent=11 // pred_check
          %p825 = pneg %p476
        $region82: #{tpu_custom_call.1} parent=11 // pred_check_branch
          %827 = sbr.rel (%p825) target = $region84
        $region83: #{tpu_custom_call.1} parent=11 // pred_region
          _
        $region84: #{tpu_custom_call.1} parent=11 // pred_fallthru
          _
        // Predicated region
        $region85: #{tpu_custom_call.1} parent=11 // pred_check
          %p828 = pneg %p497
        $region86: #{tpu_custom_call.1} parent=11 // pred_check_branch
          %830 = sbr.rel (%p828) target = $region88
        $region87: #{tpu_custom_call.1} parent=11 // pred_region
          _
        $region88: #{tpu_custom_call.1} parent=11 // pred_fallthru
          _
        // Predicated region
        $region89: #{tpu_custom_call.1} parent=11 // pred_check
          %p831 = pneg %p518
        $region90: #{tpu_custom_call.1} parent=11 // pred_check_branch
          %833 = sbr.rel (%p831) target = $region92
        $region91: #{tpu_custom_call.1} parent=11 // pred_region
          _
        $region92: #{tpu_custom_call.1} parent=11 // pred_fallthru
          _
        // Predicated region
        $region93: #{tpu_custom_call.1} parent=11 // pred_check
          %p834 = pneg %p539
        $region94: #{tpu_custom_call.1} parent=11 // pred_check_branch
          %836 = sbr.rel (%p834) target = $region96
        $region95: #{tpu_custom_call.1} parent=11 // pred_region
          _
        $region96: #{tpu_custom_call.1} parent=11 // pred_fallthru
          _
        // Predicated region
        $region97: #{tpu_custom_call.1} parent=11 // pred_check
          %p837 = pneg %p560
        $region98: #{tpu_custom_call.1} parent=11 // pred_check_branch
          %839 = sbr.rel (%p837) target = $region100
        $region99: #{tpu_custom_call.1} parent=11 // pred_region
          _
        $region100: #{tpu_custom_call.1} parent=11 // pred_fallthru
          _
        // Predicated region
        $region101: #{tpu_custom_call.1} parent=11 // pred_check
          %p840 = pneg %p581
        $region102: #{tpu_custom_call.1} parent=11 // pred_check_branch
          %842 = sbr.rel (%p840) target = $region104
        $region103: #{tpu_custom_call.1} parent=11 // pred_region
          _
        $region104: #{tpu_custom_call.1} parent=11 // pred_fallthru
          _
        // Predicated region
        $region105: #{tpu_custom_call.1} parent=11 // pred_check
          %p843 = pneg %p602
        $region106: #{tpu_custom_call.1} parent=11 // pred_check_branch
          %845 = sbr.rel (%p843) target = $region108
        $region107: #{tpu_custom_call.1} parent=11 // pred_region
          _
        $region108: #{tpu_custom_call.1} parent=11 // pred_fallthru
          _
        // Predicated region
        $region109: #{tpu_custom_call.1} parent=11 // pred_check
          %p846 = pneg %p623
        $region110: #{tpu_custom_call.1} parent=11 // pred_check_branch
          %848 = sbr.rel (%p846) target = $region112
        $region111: #{tpu_custom_call.1} parent=11 // pred_region
          _
        $region112: #{tpu_custom_call.1} parent=11 // pred_fallthru
          _
        // Predicated region
        $region113: #{tpu_custom_call.1} parent=11 // pred_check
          %p849 = pneg %p644
        $region114: #{tpu_custom_call.1} parent=11 // pred_check_branch
          %851 = sbr.rel (%p849) target = $region116
        $region115: #{tpu_custom_call.1} parent=11 // pred_region
          _
        $region116: #{tpu_custom_call.1} parent=11 // pred_fallthru
          _
        // Predicated region
        $region117: #{tpu_custom_call.1} parent=11 // pred_check
          %p852 = pneg %p665
        $region118: #{tpu_custom_call.1} parent=11 // pred_check_branch
          %854 = sbr.rel (%p852) target = $region120
        $region119: #{tpu_custom_call.1} parent=11 // pred_region
          _
        $region120: #{tpu_custom_call.1} parent=11 // pred_fallthru
          _
        // Predicated region
        $region121: #{tpu_custom_call.1} parent=11 // pred_check
          %p855 = pneg %p686
        $region122: #{tpu_custom_call.1} parent=11 // pred_check_branch
          %857 = sbr.rel (%p855) target = $region124
        $region123: #{tpu_custom_call.1} parent=11 // pred_region
          _
        $region124: #{tpu_custom_call.1} parent=11 // pred_fallthru
          _
        // Predicated region
        $region125: #{tpu_custom_call.1} parent=11 // pred_check
          %p858 = pneg %p707
        $region126: #{tpu_custom_call.1} parent=11 // pred_check_branch
          %860 = sbr.rel (%p858) target = $region128
        $region127: #{tpu_custom_call.1} parent=11 // pred_region
          _
        $region128: #{tpu_custom_call.1} parent=11 // pred_fallthru
          _
      $region12: #{tpu_custom_call.1} parent=5 // pred_fallthru
        _
      %p861 = scmp.lt.s32.totalorder %s72, 2
      // Predicated region
      $region129: #{tpu_custom_call.1} parent=5 // pred_check
        %p862 = pneg %p861
      $region130: #{tpu_custom_call.1} parent=5 // pred_check_branch
        %864 = sbr.rel (%p862) target = $region132
      $region131: #{tpu_custom_call.1} parent=5 // pred_region
        // Predicated region
        $region133: #{tpu_custom_call.1} parent=131 // pred_check
          %p865 = pneg %p92
        $region134: #{tpu_custom_call.1} parent=131 // pred_check_branch
          %867 = sbr.rel (%p865) target = $region136
        $region135: #{tpu_custom_call.1} parent=131 // pred_region
          %p868 = scmp.lt.s32.totalorder %s72, 1
          %s869 = scalar_select %p868, %s72, 1
          %s870 = smul.addr %s869, 5
          %s871 = smul.addr %s870, 8
          %s872 = scalar_lea.vmem %s1, %s871
        $region136: #{tpu_custom_call.1} parent=131 // pred_fallthru
          _
        // Predicated region
        $region137: #{tpu_custom_call.1} parent=131 // pred_check
          %p873 = pneg %p727
        $region138: #{tpu_custom_call.1} parent=131 // pred_check_branch
          %875 = sbr.rel (%p873) target = $region140
        $region139: #{tpu_custom_call.1} parent=131 // pred_region
          %p876 = scmp.lt.s32.totalorder %s72, 1
          %s877 = scalar_select %p876, %s72, 1
          %s878 = smul.addr %s877, 5
          %s879 = smul.addr %s878, 8
          %s880 = scalar_lea.vmem %s61, %s879
        $region140: #{tpu_custom_call.1} parent=131 // pred_fallthru
          _
      $region132: #{tpu_custom_call.1} parent=5 // pred_fallthru
        _
      %p881 = scmp.le.s32.totalorder 1, %s72
      %p882 = scmp.lt.s32.totalorder %s72, 3
      %p883 = pnand %p881, %p882
      %p884 = pneg %p883
      // Predicated region
      $region141: #{tpu_custom_call.1} parent=5 // pred_check
        _
      $region142: #{tpu_custom_call.1} parent=5 // pred_check_branch
        %886 = sbr.rel (%p883) target = $region144
      $region143: #{tpu_custom_call.1} parent=5 // pred_region
        %s887 = ssub.s32 %s72, 1
        %p888 = scmp.lt.s32.totalorder %s77, 1
        %s889 = scalar_select %p888, %s77, 1
        %s890 = smul.addr %s889, 5
        %s891 = smul.addr %s890, 8
        %s892 = scalar_lea.vmem %s1, %s891
        %p893 = pneg %p98
        %p894 = pneg %p95
        %p895 = pneg %p119
        %p896 = pneg %p116
        %p897 = pneg %p140
        %p898 = pneg %p137
        %p899 = pneg %p161
        %p900 = pneg %p158
        %p901 = pneg %p182
        %p902 = pneg %p179
        %p903 = pneg %p203
        %p904 = pneg %p200
        %p905 = pneg %p224
        %p906 = pneg %p221
        %p907 = pneg %p245
        %p908 = pneg %p242
        %p909 = pneg %p266
        %p910 = pneg %p263
        %p911 = pneg %p287
        %p912 = pneg %p284
        %p913 = pneg %p308
        %p914 = pneg %p305
        %p915 = pneg %p329
        %p916 = pneg %p326
        %p917 = pneg %p350
        %p918 = pneg %p347
        %p919 = pneg %p371
        %p920 = pneg %p368
        %p921 = pneg %p392
        %p922 = pneg %p389
        %p923 = pneg %p413
        %p924 = pneg %p410
        %p925 = pneg %p434
        %p926 = pneg %p431
        %p927 = pneg %p455
        %p928 = pneg %p452
        %p929 = pneg %p476
        %p930 = pneg %p473
        %p931 = pneg %p497
        %p932 = pneg %p494
        %p933 = pneg %p518
        %p934 = pneg %p515
        %p935 = pneg %p539
        %p936 = pneg %p536
        %p937 = pneg %p560
        %p938 = pneg %p557
        %p939 = pneg %p581
        %p940 = pneg %p578
        %p941 = pneg %p602
        %p942 = pneg %p599
        %p943 = pneg %p623
        %p944 = pneg %p620
        %p945 = pneg %p644
        %p946 = pneg %p641
        %p947 = pneg %p665
        %p948 = pneg %p662
        %p949 = pneg %p686
        %p950 = pneg %p683
        %p951 = pneg %p707
        %p952 = pneg %p704
        %p953 = scmp.lt.s32.totalorder %s77, 1
        %s954 = scalar_select %p953, %s77, 1
        %s955 = smul.addr %s954, 5
        %s956 = smul.addr %s955, 8
        %s957 = scalar_lea.vmem %s61, %s956
        %p958 = pneg %p733
        %p959 = pneg %p730
        %p960 = pneg %p759
        %p961 = pneg %p756
        %s962 = sand.u32 %s746, 1
        %s963 = scalar_lea.sflag [#allocation3], %s962
        %s964 = sand.u32 %s746, 1
        %s965 = smul.addr %s964, 40
        %s966 = scalar_lea.vmem [#allocation2], %s965
        %p967 = scmp.lt.s32.totalorder %s77, 1
        %s968 = scalar_select %p967, %s77, 1
        %s969 = smul.addr %s968, 5
        %s970 = smul.addr %s969, 8
        %s971 = scalar_lea.vmem %s1, %s970
        %p972 = scmp.lt.s32.totalorder %s77, 1
        %s973 = scalar_select %p972, %s77, 1
        %s974 = smul.addr %s973, 5
        %s975 = smul.addr %s974, 8
        %s976 = scalar_lea.vmem %s61, %s975
        %v978 = vld [vmem:[%s971] sm:$0xff]
        %v979 = vld [vmem:[%s971 + $0x8] sm:$0xff]
        %v980 = vld [vmem:[%s971 + $0x10] sm:$0xff]
        %v981 = vld [vmem:[%s971 + $0x18] sm:$0xff]
        %v982 = vld [vmem:[%s971 + $0x20] sm:$0xff]
        %v983 = vpack.c.bf16 %v978, %v978
        %v984 = vpack.c.bf16 %v979, %v979
        %v985 = vpack.c.bf16 %v980, %v980
        %v986 = vpack.c.bf16 %v981, %v981
        %v987 = vpack.c.bf16 %v982, %v982
        %v988 = vld [vmem:[%s3] sm:$0xf]
        %v989 = vld [vmem:[%s3 + $0x4] sm:$0xf]
        %v990 = vld [vmem:[%s3 + $0x8] sm:$0xf]
        %v991 = vld [vmem:[%s3 + $0xc] sm:$0xf]
        %v992 = vld [vmem:[%s3 + $0x10] sm:$0xf]
        %v993 = vld [vmem:[%s3 + $0x14] sm:$0xf]
        %v994 = vld [vmem:[%s3 + $0x18] sm:$0xf]
        %v995 = vld [vmem:[%s3 + $0x1c] sm:$0xf]
        %v996 = vld [vmem:[%s3 + $0x20] sm:$0xf]
        %v997 = vld [vmem:[%s3 + $0x24] sm:$0xf]
        %v998 = vld [vmem:[%s3 + $0x28] sm:$0xf]
        %v999 = vld [vmem:[%s3 + $0x2c] sm:$0xf]
        %v1000 = vld [vmem:[%s3 + $0x30] sm:$0xf]
        %v1001 = vld [vmem:[%s3 + $0x34] sm:$0xf]
        %v1002 = vld [vmem:[%s3 + $0x38] sm:$0xf]
        %v1003 = vld [vmem:[%s3 + $0x3c] sm:$0xf]
        %v1004 = vld [vmem:[%s3 + $0x40] sm:$0xf]
        %v1005 = vld [vmem:[%s3 + $0x44] sm:$0xf]
        %v1006 = vld [vmem:[%s3 + $0x48] sm:$0xf]
        %v1007 = vld [vmem:[%s3 + $0x4c] sm:$0xf]
        %v1008 = vld [vmem:[%s3 + $0x50] sm:$0xf]
        %v1009 = vld [vmem:[%s3 + $0x54] sm:$0xf]
        %v1010 = vld [vmem:[%s3 + $0x58] sm:$0xf]
        %v1011 = vld [vmem:[%s3 + $0x5c] sm:$0xf]
        %v1012 = vld [vmem:[%s3 + $0x60] sm:$0xf]
        %v1013 = vld [vmem:[%s3 + $0x64] sm:$0xf]
        %v1014 = vld [vmem:[%s3 + $0x68] sm:$0xf]
        %v1015 = vld [vmem:[%s3 + $0x6c] sm:$0xf]
        %v1016 = vld [vmem:[%s3 + $0x70] sm:$0xf]
        %v1017 = vld [vmem:[%s3 + $0x74] sm:$0xf]
        %v1018 = vld [vmem:[%s3 + $0x78] sm:$0xf]
        %v1019 = vld [vmem:[%s3 + $0x7c] sm:$0xf]
        %v1020 = vld [vmem:[%s3 + $0x80] sm:$0xf]
        %v1021 = vld [vmem:[%s3 + $0x84] sm:$0xf]
        %v1022 = vld [vmem:[%s3 + $0x88] sm:$0xf]
        %v1023 = vld [vmem:[%s3 + $0x8c] sm:$0xf]
        %v1024 = vld [vmem:[%s3 + $0x90] sm:$0xf]
        %v1025 = vld [vmem:[%s3 + $0x94] sm:$0xf]
        %v1026 = vld [vmem:[%s3 + $0x98] sm:$0xf]
        %v1027 = vld [vmem:[%s3 + $0x9c] sm:$0xf]
        %v1028 = vld [vmem:[%s3 + $0xa0] sm:$0xf]
        %v1029 = vld [vmem:[%s3 + $0xa4] sm:$0xf]
        %v1030 = vld [vmem:[%s3 + $0xa8] sm:$0xf]
        %v1031 = vld [vmem:[%s3 + $0xac] sm:$0xf]
        %v1032 = vld [vmem:[%s3 + $0xb0] sm:$0xf]
        %v1033 = vld [vmem:[%s3 + $0xb4] sm:$0xf]
        %v1034 = vld [vmem:[%s3 + $0xb8] sm:$0xf]
        %v1035 = vld [vmem:[%s3 + $0xbc] sm:$0xf]
        %v1036 = vld [vmem:[%s3 + $0xc0] sm:$0xf]
        %v1037 = vld [vmem:[%s3 + $0xc4] sm:$0xf]
        %v1038 = vld [vmem:[%s3 + $0xc8] sm:$0xf]
        %v1039 = vld [vmem:[%s3 + $0xcc] sm:$0xf]
        %v1040 = vld [vmem:[%s3 + $0xd0] sm:$0xf]
        %v1041 = vld [vmem:[%s3 + $0xd4] sm:$0xf]
        %v1042 = vld [vmem:[%s3 + $0xd8] sm:$0xf]
        %v1043 = vld [vmem:[%s3 + $0xdc] sm:$0xf]
        %v1044 = vld [vmem:[%s3 + $0xe0] sm:$0xf]
        %v1045 = vld [vmem:[%s3 + $0xe4] sm:$0xf]
        %v1046 = vld [vmem:[%s3 + $0xe8] sm:$0xf]
        %v1047 = vld [vmem:[%s3 + $0xec] sm:$0xf]
        %v1048 = vld [vmem:[%s3 + $0xf0] sm:$0xf]
        %v1049 = vld [vmem:[%s3 + $0xf4] sm:$0xf]
        %v1050 = vld [vmem:[%s3 + $0xf8] sm:$0xf]
        %v1051 = vld [vmem:[%s3 + $0xfc] sm:$0xf]
        %v1052 = vld [vmem:[%s3 + $0x100] sm:$0xf]
        %v1053 = vld [vmem:[%s3 + $0x104] sm:$0xf]
        %v1054 = vld [vmem:[%s3 + $0x108] sm:$0xf]
        %v1055 = vld [vmem:[%s3 + $0x10c] sm:$0xf]
        %v1056 = vld [vmem:[%s3 + $0x110] sm:$0xf]
        %v1057 = vld [vmem:[%s3 + $0x114] sm:$0xf]
        %v1058 = vld [vmem:[%s3 + $0x118] sm:$0xf]
        %v1059 = vld [vmem:[%s3 + $0x11c] sm:$0xf]
        %v1060 = vld [vmem:[%s3 + $0x120] sm:$0xf]
        %v1061 = vld [vmem:[%s3 + $0x124] sm:$0xf]
        %v1062 = vld [vmem:[%s3 + $0x128] sm:$0xf]
        %v1063 = vld [vmem:[%s3 + $0x12c] sm:$0xf]
        %v1064 = vld [vmem:[%s3 + $0x130] sm:$0xf]
        %v1065 = vld [vmem:[%s3 + $0x134] sm:$0xf]
        %v1066 = vld [vmem:[%s3 + $0x138] sm:$0xf]
        %v1067 = vld [vmem:[%s3 + $0x13c] sm:$0xf]
        %v1068 = vld [vmem:[%s5] sm:$0x1]
        %v1070 = vperm.slane %v1068, 0
        %v1152 = vunpack.c.l.b16 %v988
        %v1153 = vunpack.c.l.b16 %v989
        %v1154 = vunpack.c.l.b16 %v990
        %v1155 = vunpack.c.l.b16 %v991
        %v1156 = vunpack.c.l.b16 %v992
        %v1157 = vunpack.c.l.b16 %v993
        %v1158 = vunpack.c.l.b16 %v994
        %v1159 = vunpack.c.l.b16 %v995
        %v1160 = vunpack.c.l.b16 %v996
        %v1161 = vunpack.c.l.b16 %v997
        %v1162 = vunpack.c.l.b16 %v998
        %v1163 = vunpack.c.l.b16 %v999
        %v1164 = vunpack.c.l.b16 %v1000
        %v1165 = vunpack.c.l.b16 %v1001
        %v1166 = vunpack.c.l.b16 %v1002
        %v1167 = vunpack.c.l.b16 %v1003
        %v1168 = vunpack.c.l.b16 %v1004
        %v1169 = vunpack.c.l.b16 %v1005
        %v1170 = vunpack.c.l.b16 %v1006
        %v1171 = vunpack.c.l.b16 %v1007
        %v1172 = vunpack.c.l.b16 %v1008
        %v1173 = vunpack.c.l.b16 %v1009
        %v1174 = vunpack.c.l.b16 %v1010
        %v1175 = vunpack.c.l.b16 %v1011
        %v1176 = vunpack.c.l.b16 %v1012
        %v1177 = vunpack.c.l.b16 %v1013
        %v1178 = vunpack.c.l.b16 %v1014
        %v1179 = vunpack.c.l.b16 %v1015
        %v1180 = vunpack.c.l.b16 %v1016
        %v1181 = vunpack.c.l.b16 %v1017
        %v1182 = vunpack.c.l.b16 %v1018
        %v1183 = vunpack.c.l.b16 %v1019
        %v1184 = vunpack.c.l.b16 %v1020
        %v1185 = vunpack.c.l.b16 %v1021
        %v1186 = vunpack.c.l.b16 %v1022
        %v1187 = vunpack.c.l.b16 %v1023
        %v1188 = vunpack.c.l.b16 %v1024
        %v1189 = vunpack.c.l.b16 %v1025
        %v1190 = vunpack.c.l.b16 %v1026
        %v1191 = vunpack.c.l.b16 %v1027
        %v1192 = vunpack.c.l.b16 %v1028
        %v1193 = vunpack.c.l.b16 %v1029
        %v1194 = vunpack.c.l.b16 %v1030
        %v1195 = vunpack.c.l.b16 %v1031
        %v1196 = vunpack.c.l.b16 %v1032
        %v1197 = vunpack.c.l.b16 %v1033
        %v1198 = vunpack.c.l.b16 %v1034
        %v1199 = vunpack.c.l.b16 %v1035
        %v1200 = vunpack.c.l.b16 %v1036
        %v1201 = vunpack.c.l.b16 %v1037
        %v1202 = vunpack.c.l.b16 %v1038
        %v1203 = vunpack.c.l.b16 %v1039
        %v1204 = vunpack.c.l.b16 %v1040
        %v1205 = vunpack.c.l.b16 %v1041
        %v1206 = vunpack.c.l.b16 %v1042
        %v1207 = vunpack.c.l.b16 %v1043
        %v1208 = vunpack.c.l.b16 %v1044
        %v1209 = vunpack.c.l.b16 %v1045
        %v1210 = vunpack.c.l.b16 %v1046
        %v1211 = vunpack.c.l.b16 %v1047
        %v1212 = vunpack.c.l.b16 %v1048
        %v1213 = vunpack.c.l.b16 %v1049
        %v1214 = vunpack.c.l.b16 %v1050
        %v1215 = vunpack.c.l.b16 %v1051
        %v1216 = vunpack.c.l.b16 %v1052
        %v1217 = vunpack.c.l.b16 %v1053
        %v1218 = vunpack.c.l.b16 %v1054
        %v1219 = vunpack.c.l.b16 %v1055
        %v1220 = vunpack.c.l.b16 %v1056
        %v1221 = vunpack.c.l.b16 %v1057
        %v1222 = vunpack.c.l.b16 %v1058
        %v1223 = vunpack.c.l.b16 %v1059
        %v1224 = vunpack.c.l.b16 %v1060
        %v1225 = vunpack.c.l.b16 %v1061
        %v1226 = vunpack.c.l.b16 %v1062
        %v1227 = vunpack.c.l.b16 %v1063
        %v1228 = vunpack.c.l.b16 %v1064
        %v1229 = vunpack.c.l.b16 %v1065
        %v1230 = vunpack.c.l.b16 %v1066
        %v1231 = vunpack.c.l.b16 %v1067
        %v1232 = vpack.c.b16 %v1153, %v1152
        %v1233 = vpack.c.b16 %v1155, %v1154
        %v1234 = vpack.c.b16 %v1157, %v1156
        %v1235 = vpack.c.b16 %v1159, %v1158
        %v1236 = vpack.c.b16 %v1161, %v1160
        %v1237 = vpack.c.b16 %v1163, %v1162
        %v1238 = vpack.c.b16 %v1165, %v1164
        %v1239 = vpack.c.b16 %v1167, %v1166
        %v1240 = vpack.c.b16 %v1169, %v1168
        %v1241 = vpack.c.b16 %v1171, %v1170
        %v1242 = vpack.c.b16 %v1173, %v1172
        %v1243 = vpack.c.b16 %v1175, %v1174
        %v1244 = vpack.c.b16 %v1177, %v1176
        %v1245 = vpack.c.b16 %v1179, %v1178
        %v1246 = vpack.c.b16 %v1181, %v1180
        %v1247 = vpack.c.b16 %v1183, %v1182
        %v1248 = vpack.c.b16 %v1185, %v1184
        %v1249 = vpack.c.b16 %v1187, %v1186
        %v1250 = vpack.c.b16 %v1189, %v1188
        %v1251 = vpack.c.b16 %v1191, %v1190
        %v1252 = vpack.c.b16 %v1193, %v1192
        %v1253 = vpack.c.b16 %v1195, %v1194
        %v1254 = vpack.c.b16 %v1197, %v1196
        %v1255 = vpack.c.b16 %v1199, %v1198
        %v1256 = vpack.c.b16 %v1201, %v1200
        %v1257 = vpack.c.b16 %v1203, %v1202
        %v1258 = vpack.c.b16 %v1205, %v1204
        %v1259 = vpack.c.b16 %v1207, %v1206
        %v1260 = vpack.c.b16 %v1209, %v1208
        %v1261 = vpack.c.b16 %v1211, %v1210
        %v1262 = vpack.c.b16 %v1213, %v1212
        %v1263 = vpack.c.b16 %v1215, %v1214
        %v1264 = vpack.c.b16 %v1217, %v1216
        %v1265 = vpack.c.b16 %v1219, %v1218
        %v1266 = vpack.c.b16 %v1221, %v1220
        %v1267 = vpack.c.b16 %v1223, %v1222
        %v1268 = vpack.c.b16 %v1225, %v1224
        %v1269 = vpack.c.b16 %v1227, %v1226
        %v1270 = vpack.c.b16 %v1229, %v1228
        %v1271 = vpack.c.b16 %v1231, %v1230
        %1312 = vmatpush.bf16.msra.mxu0 %v1239
        %1313 = vmatpush.bf16.msra.mxu0 %v1238
        %1314 = vmatpush.bf16.msra.mxu0 %v1237
        %1315 = vmatpush.bf16.msra.mxu0 %v1236
        %1316 = vmatpush.bf16.msra.mxu0 %v1235
        %1317 = vmatpush.bf16.msra.mxu0 %v1234
        %1318 = vmatpush.bf16.msra.mxu0 %v1233
        %1319 = vmatpush.bf16.msra.mxu0 %v1232
        %1320 = vmatmul.bf16.gmra.mxu0 %v983
        %v1321 = vpop.f32.mrf.mxu0
        %v1322 = vadd.f32 %v1070, %v1321
        %v1323 = vpop.f32.mrf.mxu0
        %1324 = vdwg.mxu0
        %1325 = vmatpush.bf16.msra.mxu0 %v1247
        %1326 = vmatpush.bf16.msra.mxu0 %v1246
        %1327 = vmatpush.bf16.msra.mxu0 %v1245
        %1328 = vmatpush.bf16.msra.mxu0 %v1244
        %1329 = vmatpush.bf16.msra.mxu0 %v1243
        %1330 = vmatpush.bf16.msra.mxu0 %v1242
        %1331 = vmatpush.bf16.msra.mxu0 %v1241
        %1332 = vmatpush.bf16.msra.mxu0 %v1240
        %1333 = vmatmul.bf16.gmra.mxu0 %v984
        %v1334 = vpop.f32.mrf.mxu0
        %v1335 = vadd.f32 %v1322, %v1334
        %v1336 = vpop.f32.mrf.mxu0
        %1337 = vdwg.mxu0
        %1338 = vmatpush.bf16.msra.mxu0 %v1255
        %1339 = vmatpush.bf16.msra.mxu0 %v1254
        %1340 = vmatpush.bf16.msra.mxu0 %v1253
        %1341 = vmatpush.bf16.msra.mxu0 %v1252
        %1342 = vmatpush.bf16.msra.mxu0 %v1251
        %1343 = vmatpush.bf16.msra.mxu0 %v1250
        %1344 = vmatpush.bf16.msra.mxu0 %v1249
        %1345 = vmatpush.bf16.msra.mxu0 %v1248
        %1346 = vmatmul.bf16.gmra.mxu0 %v985
        %v1347 = vpop.f32.mrf.mxu0
        %v1348 = vadd.f32 %v1335, %v1347
        %v1349 = vpop.f32.mrf.mxu0
        %1350 = vdwg.mxu0
        %1351 = vmatpush.bf16.msra.mxu0 %v1263
        %1352 = vmatpush.bf16.msra.mxu0 %v1262
        %1353 = vmatpush.bf16.msra.mxu0 %v1261
        %1354 = vmatpush.bf16.msra.mxu0 %v1260
        %1355 = vmatpush.bf16.msra.mxu0 %v1259
        %1356 = vmatpush.bf16.msra.mxu0 %v1258
        %1357 = vmatpush.bf16.msra.mxu0 %v1257
        %1358 = vmatpush.bf16.msra.mxu0 %v1256
        %1359 = vmatmul.bf16.gmra.mxu0 %v986
        %v1360 = vpop.f32.mrf.mxu0
        %v1361 = vadd.f32 %v1348, %v1360
        %v1362 = vpop.f32.mrf.mxu0
        %1363 = vdwg.mxu0
        %1364 = vmatpush.bf16.msra.mxu0 %v1271
        %1365 = vmatpush.bf16.msra.mxu0 %v1270
        %1366 = vmatpush.bf16.msra.mxu0 %v1269
        %1367 = vmatpush.bf16.msra.mxu0 %v1268
        %1368 = vmatpush.bf16.msra.mxu0 %v1267
        %1369 = vmatpush.bf16.msra.mxu0 %v1266
        %1370 = vmatpush.bf16.msra.mxu0 %v1265
        %1371 = vmatpush.bf16.msra.mxu0 %v1264
        %1372 = vmatmul.bf16.gmra.mxu0 %v987
        %v1373 = vpop.f32.mrf.mxu0
        %v1374 = vadd.f32 %v1361, %v1373
        %v1375 = vpop.f32.mrf.mxu0
        %1376 = vdwg.mxu0
        %v1377 = vld [vmem:[%s7] sm:$0xff]
        %v1378 = vadd.f32 %v1374, %v1377
        %v1379 = vld [vmem:[%s9] sm:$0xf]
        %v1380 = vld [vmem:[%s9 + $0x4] sm:$0xf]
        %v1381 = vld [vmem:[%s9 + $0x8] sm:$0xf]
        %v1382 = vld [vmem:[%s9 + $0xc] sm:$0xf]
        %v1383 = vld [vmem:[%s11] sm:$0x1]
        %v1384 = vld [vmem:[%s13] sm:$0xf]
        %v1385 = vld [vmem:[%s13 + $0x4] sm:$0xf]
        %v1386 = vld [vmem:[%s13 + $0x8] sm:$0xf]
        %v1387 = vld [vmem:[%s13 + $0xc] sm:$0xf]
        %v1388 = vld [vmem:[%s15] sm:$0x1]
        %v1389 = vld [vmem:[%s17] sm:$0x1]
        %v1390 = vld [vmem:[%s19] sm:$0x1]
        %v1391 = vld [vmem:[%s21] sm:$0xf]
        %v1392 = vld [vmem:[%s21 + $0x4] sm:$0xf]
        %v1393 = vld [vmem:[%s21 + $0x8] sm:$0xf]
        %v1394 = vld [vmem:[%s21 + $0xc] sm:$0xf]
        %v1395 = vld [vmem:[%s23] sm:$0x1]
        %v1396 = vld [vmem:[%s25] sm:$0xf]
        %v1397 = vld [vmem:[%s25 + $0x4] sm:$0xf]
        %v1398 = vld [vmem:[%s25 + $0x8] sm:$0xf]
        %v1399 = vld [vmem:[%s25 + $0xc] sm:$0xf]
        %v1400 = vld [vmem:[%s25 + $0x10] sm:$0xf]
        %v1401 = vld [vmem:[%s25 + $0x14] sm:$0xf]
        %v1402 = vld [vmem:[%s25 + $0x18] sm:$0xf]
        %v1403 = vld [vmem:[%s25 + $0x1c] sm:$0xf]
        %v1404 = vld [vmem:[%s25 + $0x20] sm:$0xf]
        %v1405 = vld [vmem:[%s25 + $0x24] sm:$0xf]
        %v1406 = vld [vmem:[%s25 + $0x28] sm:$0xf]
        %v1407 = vld [vmem:[%s25 + $0x2c] sm:$0xf]
        %v1408 = vld [vmem:[%s25 + $0x30] sm:$0xf]
        %v1409 = vld [vmem:[%s25 + $0x34] sm:$0xf]
        %v1410 = vld [vmem:[%s25 + $0x38] sm:$0xf]
        %v1411 = vld [vmem:[%s25 + $0x3c] sm:$0xf]
        %v1412 = vld [vmem:[%s27] sm:$0x1]
        %v1413 = vld [vmem:[%s29] sm:$0x1]
        %v1414 = vld [vmem:[%s31] sm:$0x1]
        %v1415 = vpack.c.bf16 %v1378, %v1378
        %v1417 = vperm.slane %v1383, 0
        %v1423 = vunpack.c.l.b16 %v1379
        %v1424 = vunpack.c.l.b16 %v1380
        %v1425 = vunpack.c.l.b16 %v1381
        %v1426 = vunpack.c.l.b16 %v1382
        %v1427 = vpack.c.b16 %v1424, %v1423
        %v1428 = vpack.c.b16 %v1426, %v1425
        %vm1431 = vcmask 261120
        %v1433 = vsel %vm1431, %v1415, 0
        %1435 = vmatpush.bf16.msra.mxu0 0
        %1436 = vmatpush.bf16.msra.mxu0 0
        %1437 = vmatpush.bf16.msra.mxu0 0
        %1438 = vmatpush.bf16.msra.mxu0 0
        %1439 = vmatpush.bf16.msra.mxu0 0
        %1440 = vmatpush.bf16.msra.mxu0 0
        %1441 = vmatpush.bf16.msra.mxu0 %v1428
        %1442 = vmatpush.bf16.msra.mxu0 %v1427
        %1443 = vmatmul.bf16.gmra.mxu0 %v1433
        %v1444 = vpop.f32.mrf.mxu0
        %v1445 = vadd.f32 %v1417, %v1444
        %v1446 = vpop.f32.mrf.mxu0
        %1447 = vdwg.mxu0
        %1449 = vrot.lane.b32.xlu0 %v1445, 112
        %v1450 = vpop.permute.xlu0 %1449
        %v1452 = vpack.c.bf16 %v1445, %v1445
        %v1453 = vpack.c.bf16 %v1450, %v1450
        %v1455 = vunpack.c.l.b16 %v1452
        %v1456 = vpack.c.b16 %v1455, %v1455
        %1457 = vrot.lane.b32.xlu0 %v1456, 96
        %v1458 = vpop.permute.xlu0 %1457
        %vm1459 = vcmask 130048
        %v1461 = vsel %vm1459, %v1452, 0
        %v1464 = vsel %vm1459, %v1458, 0
        %1466 = vmatpush.bf16.xpose.msra.mxu0 0
        %1467 = vmatpush.bf16.xpose.msra.mxu0 0
        %1468 = vmatpush.bf16.xpose.msra.mxu0 0
        %1469 = vmatpush.bf16.xpose.msra.mxu0 0
        %1470 = vmatpush.bf16.xpose.msra.mxu0 0
        %1471 = vmatpush.bf16.xpose.msra.mxu0 0
        %1472 = vmatpush.bf16.xpose.msra.mxu0 0
        %1473 = vmatpush.bf16.xpose.msra.mxu0 %v1464
        %1474 = vmatmul.bf16.gmra.mxu0 %v1461
        %v1475 = vpop.f32.mrf.mxu0
        %v1476 = vadd.f32 0.0, %v1475
        %v1477 = vpop.f32.mrf.mxu0
        %1478 = vdwg.mxu0
        %v1480 = vunpack.c.l.b16 %v1453
        %v1481 = vpack.c.b16 %v1480, %v1480
        %1482 = vrot.lane.b32.xlu0 %v1481, 96
        %v1483 = vpop.permute.xlu0 %1482
        %v1485 = vsel %vm1459, %v1453, 0
        %v1488 = vsel %vm1459, %v1483, 0
        %1490 = vmatpush.bf16.xpose.msra.mxu0 0
        %1491 = vmatpush.bf16.xpose.msra.mxu0 0
        %1492 = vmatpush.bf16.xpose.msra.mxu0 0
        %1493 = vmatpush.bf16.xpose.msra.mxu0 0
        %1494 = vmatpush.bf16.xpose.msra.mxu0 0
        %1495 = vmatpush.bf16.xpose.msra.mxu0 0
        %1496 = vmatpush.bf16.xpose.msra.mxu0 0
        %1497 = vmatpush.bf16.xpose.msra.mxu0 %v1488
        %1498 = vmatmul.bf16.gmra.mxu0 %v1485
        %v1499 = vpop.f32.mrf.mxu0
        %v1500 = vadd.f32 0.0, %v1499
        %v1501 = vpop.f32.mrf.mxu0
        %1502 = vdwg.mxu0
        %vm1503 = vcmask 64512
        %v1504 = vsel %vm1503, %v1476, -inf
        %1505 = vmax.xlane.f32.xlu0 %v1504
        %v1506 = vpop.xlane.xlu0 %1505
        %v1507 = vsel %vm1503, %v1500, -inf
        %1508 = vmax.xlane.f32.xlu0 %v1507
        %v1509 = vpop.xlane.xlu0 %1508
        %v1510 = vsub.f32 %v1476, %v1506
        %v1511 = vsub.f32 %v1500, %v1509
        %v1512 = vmul.f32 %v1510, 1.442695
        %v1513 = vpow.pop %v1512
        %v1514 = vmul.f32 %v1511, 1.442695
        %v1515 = vpow.pop %v1514
        %v1516 = vsel %vm1503, %v1513, 0.0
        %1517 = vadd.xlane.f32.xlu0 %v1516
        %v1518 = vpop.xlane.xlu0 %1517
        %v1519 = vsel %vm1503, %v1515, 0.0
        %1520 = vadd.xlane.f32.xlu0 %v1519
        %v1521 = vpop.xlane.xlu0 %1520
        %v1522 = vrcp.pop %v1518
        %v1523 = vrcp.pop %v1521
        %v1524 = vmul.f32 %v1513, %v1522
        %v1525 = vmul.f32 %v1515, %v1523
        %v1526 = vpack.c.bf16 %v1524, %v1524
        %v1527 = vpack.c.bf16 %v1525, %v1525
        %1528 = vrot.lane.b32.xlu0 %v1456, 64
        %v1529 = vpop.permute.xlu0 %1528
        %v1531 = vsel %vm1503, %v1526, 0
        %vm1533 = vcmask 1043456
        %v1535 = vsel %vm1533, %v1529, 0
        %1537 = vmatpush.bf16.msra.mxu0 0
        %1538 = vmatpush.bf16.msra.mxu0 0
        %1539 = vmatpush.bf16.msra.mxu0 0
        %1540 = vmatpush.bf16.msra.mxu0 0
        %1541 = vmatpush.bf16.msra.mxu0 0
        %1542 = vmatpush.bf16.msra.mxu0 0
        %1543 = vmatpush.bf16.msra.mxu0 0
        %1544 = vmatpush.bf16.msra.mxu0 %v1535
        %1545 = vmatmul.bf16.gmra.mxu0 %v1531
        %v1546 = vpop.f32.mrf.mxu0
        %v1547 = vadd.f32 0.0, %v1546
        %v1548 = vpop.f32.mrf.mxu0
        %1549 = vdwg.mxu0
        %1550 = vrot.lane.b32.xlu0 %v1481, 64
        %v1551 = vpop.permute.xlu0 %1550
        %v1553 = vsel %vm1503, %v1527, 0
        %v1556 = vsel %vm1533, %v1551, 0
        %1558 = vmatpush.bf16.msra.mxu0 0
        %1559 = vmatpush.bf16.msra.mxu0 0
        %1560 = vmatpush.bf16.msra.mxu0 0
        %1561 = vmatpush.bf16.msra.mxu0 0
        %1562 = vmatpush.bf16.msra.mxu0 0
        %1563 = vmatpush.bf16.msra.mxu0 0
        %1564 = vmatpush.bf16.msra.mxu0 0
        %1565 = vmatpush.bf16.msra.mxu0 %v1556
        %1566 = vmatmul.bf16.gmra.mxu0 %v1553
        %v1567 = vpop.f32.mrf.mxu0
        %v1568 = vadd.f32 0.0, %v1567
        %v1569 = vpop.f32.mrf.mxu0
        %1570 = vdwg.mxu0
        %1572 = vrot.lane.b32.xlu0 %v1568, 16
        %v1573 = vpop.permute.xlu0 %1572
        %v1575 = vsel %vm1459, %v1547, %v1573
        %v1576 = vpack.c.bf16 %v1575, %v1575
        %v1578 = vperm.slane %v1388, 0
        %v1584 = vunpack.c.l.b16 %v1384
        %v1585 = vunpack.c.l.b16 %v1385
        %v1586 = vunpack.c.l.b16 %v1386
        %v1587 = vunpack.c.l.b16 %v1387
        %v1588 = vpack.c.b16 %v1585, %v1584
        %v1589 = vpack.c.b16 %v1587, %v1586
        %v1593 = vsel %vm1431, %v1576, 0
        %1595 = vmatpush.bf16.msra.mxu0 0
        %1596 = vmatpush.bf16.msra.mxu0 0
        %1597 = vmatpush.bf16.msra.mxu0 0
        %1598 = vmatpush.bf16.msra.mxu0 0
        %1599 = vmatpush.bf16.msra.mxu0 0
        %1600 = vmatpush.bf16.msra.mxu0 0
        %1601 = vmatpush.bf16.msra.mxu0 %v1589
        %1602 = vmatpush.bf16.msra.mxu0 %v1588
        %1603 = vmatmul.bf16.gmra.mxu0 %v1593
        %v1604 = vpop.f32.mrf.mxu0
        %v1605 = vadd.f32 %v1578, %v1604
        %v1606 = vpop.f32.mrf.mxu0
        %1607 = vdwg.mxu0
        %v1608 = vadd.f32 %v1378, %v1605
        %v1609 = vsel %vm1431, %v1608, 0.0
        %1610 = vadd.xlane.f32.xlu0 %v1609
        %v1611 = vpop.xlane.xlu0 %1610
        %v1612 = vrcp.pop 32.0
        %v1613 = vmul.f32 32.0, %v1612
        %v1614 = vsub.f32 1.0, %v1613
        %v1615 = vmul.f32 %v1612, %v1614
        %v1616 = vadd.f32 %v1612, %v1615
        %vm1617 = vweird.f32 %v1612
        %v1618 = vsel %vm1617, %v1612, %v1616
        %v1619 = vmul.f32 %v1611, %v1618
        %v1620 = vsub.f32 %v1608, %v1619
        %v1621 = vmul.f32 %v1620, %v1620
        %v1622 = vsel %vm1431, %v1621, 0.0
        %1623 = vadd.xlane.f32.xlu0 %v1622
        %v1624 = vpop.xlane.xlu0 %1623
        %v1625 = vmul.f32 %v1624, %v1618
        %v1626 = vadd.f32 %v1625, 1e-05
        %v1627 = vrsqrt.pop %v1626
        %v1628 = vmul.f32 %v1627, %v1626
        %v1629 = vmul.f32 %v1628, %v1627
        %v1630 = vmul.f32 0.5, %v1629
        %v1631 = vsub.f32 1.5, %v1630
        %v1632 = vmul.f32 %v1627, %v1631
        %vm1633 = vweird.f32 %v1626
        %vm1634 = vweird.f32 %v1627
        %vm1635 = vmor %vm1633, %vm1634
        %v1636 = vsel %vm1635, %v1627, %v1632
        %v1637 = vmul.f32 %v1620, %v1636
        %v1639 = vperm.slane %v1389, 0
        %v1641 = vmul.f32 %v1637, %v1639
        %v1643 = vperm.slane %v1390, 0
        %v1645 = vadd.f32 %v1641, %v1643
        %v1646 = vpack.c.bf16 %v1645, %v1645
        %v1648 = vperm.slane %v1395, 0
        %v1654 = vunpack.c.l.b16 %v1391
        %v1655 = vunpack.c.l.b16 %v1392
        %v1656 = vunpack.c.l.b16 %v1393
        %v1657 = vunpack.c.l.b16 %v1394
        %v1658 = vpack.c.b16 %v1655, %v1654
        %v1659 = vpack.c.b16 %v1657, %v1656
        %v1663 = vsel %vm1431, %v1646, 0
        %1665 = vmatpush.bf16.msra.mxu0 0
        %1666 = vmatpush.bf16.msra.mxu0 0
        %1667 = vmatpush.bf16.msra.mxu0 0
        %1668 = vmatpush.bf16.msra.mxu0 0
        %1669 = vmatpush.bf16.msra.mxu0 0
        %1670 = vmatpush.bf16.msra.mxu0 0
        %1671 = vmatpush.bf16.msra.mxu0 %v1659
        %1672 = vmatpush.bf16.msra.mxu0 %v1658
        %1673 = vmatmul.bf16.gmra.mxu0 %v1663
        %v1674 = vpop.f32.mrf.mxu0
        %v1675 = vadd.f32 %v1648, %v1674
        %v1676 = vpop.f32.mrf.mxu0
        %1677 = vdwg.mxu0
        %v1678 = vmax.f32 %v1675, 0.0
        %v1679 = vpack.c.bf16 %v1678, %v1678
        %v1681 = vperm.slane %v1412, 0
        %v1699 = vunpack.c.l.b16 %v1396
        %v1700 = vunpack.c.l.b16 %v1397
        %v1701 = vunpack.c.l.b16 %v1398
        %v1702 = vunpack.c.l.b16 %v1399
        %v1703 = vunpack.c.l.b16 %v1400
        %v1704 = vunpack.c.l.b16 %v1401
        %v1705 = vunpack.c.l.b16 %v1402
        %v1706 = vunpack.c.l.b16 %v1403
        %v1707 = vunpack.c.l.b16 %v1404
        %v1708 = vunpack.c.l.b16 %v1405
        %v1709 = vunpack.c.l.b16 %v1406
        %v1710 = vunpack.c.l.b16 %v1407
        %v1711 = vunpack.c.l.b16 %v1408
        %v1712 = vunpack.c.l.b16 %v1409
        %v1713 = vunpack.c.l.b16 %v1410
        %v1714 = vunpack.c.l.b16 %v1411
        %v1715 = vpack.c.b16 %v1700, %v1699
        %v1716 = vpack.c.b16 %v1702, %v1701
        %v1717 = vpack.c.b16 %v1704, %v1703
        %v1718 = vpack.c.b16 %v1706, %v1705
        %v1719 = vpack.c.b16 %v1708, %v1707
        %v1720 = vpack.c.b16 %v1710, %v1709
        %v1721 = vpack.c.b16 %v1712, %v1711
        %v1722 = vpack.c.b16 %v1714, %v1713
        %1731 = vmatpush.bf16.msra.mxu0 %v1722
        %1732 = vmatpush.bf16.msra.mxu0 %v1721
        %1733 = vmatpush.bf16.msra.mxu0 %v1720
        %1734 = vmatpush.bf16.msra.mxu0 %v1719
        %1735 = vmatpush.bf16.msra.mxu0 %v1718
        %1736 = vmatpush.bf16.msra.mxu0 %v1717
        %1737 = vmatpush.bf16.msra.mxu0 %v1716
        %1738 = vmatpush.bf16.msra.mxu0 %v1715
        %1739 = vmatmul.bf16.gmra.mxu0 %v1679
        %v1740 = vpop.f32.mrf.mxu0
        %v1741 = vadd.f32 %v1681, %v1740
        %v1742 = vpop.f32.mrf.mxu0
        %1743 = vdwg.mxu0
        %v1744 = vadd.f32 %v1645, %v1741
        %v1745 = vsel %vm1431, %v1744, 0.0
        %1746 = vadd.xlane.f32.xlu0 %v1745
        %v1747 = vpop.xlane.xlu0 %1746
        %v1748 = vmul.f32 %v1747, %v1618
        %v1749 = vsub.f32 %v1744, %v1748
        %v1750 = vmul.f32 %v1749, %v1749
        %v1751 = vsel %vm1431, %v1750, 0.0
        %1752 = vadd.xlane.f32.xlu0 %v1751
        %v1753 = vpop.xlane.xlu0 %1752
        %v1754 = vmul.f32 %v1753, %v1618
        %v1755 = vadd.f32 %v1754, 1e-05
        %v1756 = vrsqrt.pop %v1755
        %v1757 = vmul.f32 %v1756, %v1755
        %v1758 = vmul.f32 %v1757, %v1756
        %v1759 = vmul.f32 0.5, %v1758
        %v1760 = vsub.f32 1.5, %v1759
        %v1761 = vmul.f32 %v1756, %v1760
        %vm1762 = vweird.f32 %v1755
        %vm1763 = vweird.f32 %v1756
        %vm1764 = vmor %vm1762, %vm1763
        %v1765 = vsel %vm1764, %v1756, %v1761
        %v1766 = vmul.f32 %v1749, %v1765
        %v1768 = vperm.slane %v1413, 0
        %v1770 = vmul.f32 %v1766, %v1768
        %v1772 = vperm.slane %v1414, 0
        %v1774 = vadd.f32 %v1770, %v1772
        %v1775 = vld [vmem:[%s33] sm:$0xf]
        %v1776 = vld [vmem:[%s33 + $0x4] sm:$0xf]
        %v1777 = vld [vmem:[%s33 + $0x8] sm:$0xf]
        %v1778 = vld [vmem:[%s33 + $0xc] sm:$0xf]
        %v1779 = vld [vmem:[%s35] sm:$0x1]
        %v1780 = vld [vmem:[%s37] sm:$0xf]
        %v1781 = vld [vmem:[%s37 + $0x4] sm:$0xf]
        %v1782 = vld [vmem:[%s37 + $0x8] sm:$0xf]
        %v1783 = vld [vmem:[%s37 + $0xc] sm:$0xf]
        %v1784 = vld [vmem:[%s39] sm:$0x1]
        %v1785 = vld [vmem:[%s41] sm:$0x1]
        %v1786 = vld [vmem:[%s43] sm:$0x1]
        %v1787 = vld [vmem:[%s45] sm:$0xf]
        %v1788 = vld [vmem:[%s45 + $0x4] sm:$0xf]
        %v1789 = vld [vmem:[%s45 + $0x8] sm:$0xf]
        %v1790 = vld [vmem:[%s45 + $0xc] sm:$0xf]
        %v1791 = vld [vmem:[%s47] sm:$0x1]
        %v1792 = vld [vmem:[%s49] sm:$0xf]
        %v1793 = vld [vmem:[%s49 + $0x4] sm:$0xf]
        %v1794 = vld [vmem:[%s49 + $0x8] sm:$0xf]
        %v1795 = vld [vmem:[%s49 + $0xc] sm:$0xf]
        %v1796 = vld [vmem:[%s49 + $0x10] sm:$0xf]
        %v1797 = vld [vmem:[%s49 + $0x14] sm:$0xf]
        %v1798 = vld [vmem:[%s49 + $0x18] sm:$0xf]
        %v1799 = vld [vmem:[%s49 + $0x1c] sm:$0xf]
        %v1800 = vld [vmem:[%s49 + $0x20] sm:$0xf]
        %v1801 = vld [vmem:[%s49 + $0x24] sm:$0xf]
        %v1802 = vld [vmem:[%s49 + $0x28] sm:$0xf]
        %v1803 = vld [vmem:[%s49 + $0x2c] sm:$0xf]
        %v1804 = vld [vmem:[%s49 + $0x30] sm:$0xf]
        %v1805 = vld [vmem:[%s49 + $0x34] sm:$0xf]
        %v1806 = vld [vmem:[%s49 + $0x38] sm:$0xf]
        %v1807 = vld [vmem:[%s49 + $0x3c] sm:$0xf]
        %v1808 = vld [vmem:[%s51] sm:$0x1]
        %v1809 = vld [vmem:[%s53] sm:$0x1]
        %v1810 = vld [vmem:[%s55] sm:$0x1]
        %v1811 = vpack.c.bf16 %v1774, %v1774
        %v1813 = vperm.slane %v1779, 0
        %v1819 = vunpack.c.l.b16 %v1775
        %v1820 = vunpack.c.l.b16 %v1776
        %v1821 = vunpack.c.l.b16 %v1777
        %v1822 = vunpack.c.l.b16 %v1778
        %v1823 = vpack.c.b16 %v1820, %v1819
        %v1824 = vpack.c.b16 %v1822, %v1821
        %v1828 = vsel %vm1431, %v1811, 0
        %1830 = vmatpush.bf16.msra.mxu0 0
        %1831 = vmatpush.bf16.msra.mxu0 0
        %1832 = vmatpush.bf16.msra.mxu0 0
        %1833 = vmatpush.bf16.msra.mxu0 0
        %1834 = vmatpush.bf16.msra.mxu0 0
        %1835 = vmatpush.bf16.msra.mxu0 0
        %1836 = vmatpush.bf16.msra.mxu0 %v1824
        %1837 = vmatpush.bf16.msra.mxu0 %v1823
        %1838 = vmatmul.bf16.gmra.mxu0 %v1828
        %v1839 = vpop.f32.mrf.mxu0
        %v1840 = vadd.f32 %v1813, %v1839
        %v1841 = vpop.f32.mrf.mxu0
        %1842 = vdwg.mxu0
        %1844 = vrot.lane.b32.xlu0 %v1840, 112
        %v1845 = vpop.permute.xlu0 %1844
        %v1847 = vpack.c.bf16 %v1840, %v1840
        %v1848 = vpack.c.bf16 %v1845, %v1845
        %v1850 = vunpack.c.l.b16 %v1847
        %v1851 = vpack.c.b16 %v1850, %v1850
        %1852 = vrot.lane.b32.xlu0 %v1851, 96
        %v1853 = vpop.permute.xlu0 %1852
        %v1855 = vsel %vm1459, %v1847, 0
        %v1858 = vsel %vm1459, %v1853, 0
        %1860 = vmatpush.bf16.xpose.msra.mxu0 0
        %1861 = vmatpush.bf16.xpose.msra.mxu0 0
        %1862 = vmatpush.bf16.xpose.msra.mxu0 0
        %1863 = vmatpush.bf16.xpose.msra.mxu0 0
        %1864 = vmatpush.bf16.xpose.msra.mxu0 0
        %1865 = vmatpush.bf16.xpose.msra.mxu0 0
        %1866 = vmatpush.bf16.xpose.msra.mxu0 0
        %1867 = vmatpush.bf16.xpose.msra.mxu0 %v1858
        %1868 = vmatmul.bf16.gmra.mxu0 %v1855
        %v1869 = vpop.f32.mrf.mxu0
        %v1870 = vadd.f32 0.0, %v1869
        %v1871 = vpop.f32.mrf.mxu0
        %1872 = vdwg.mxu0
        %v1874 = vunpack.c.l.b16 %v1848
        %v1875 = vpack.c.b16 %v1874, %v1874
        %1876 = vrot.lane.b32.xlu0 %v1875, 96
        %v1877 = vpop.permute.xlu0 %1876
        %v1879 = vsel %vm1459, %v1848, 0
        %v1882 = vsel %vm1459, %v1877, 0
        %1884 = vmatpush.bf16.xpose.msra.mxu0 0
        %1885 = vmatpush.bf16.xpose.msra.mxu0 0
        %1886 = vmatpush.bf16.xpose.msra.mxu0 0
        %1887 = vmatpush.bf16.xpose.msra.mxu0 0
        %1888 = vmatpush.bf16.xpose.msra.mxu0 0
        %1889 = vmatpush.bf16.xpose.msra.mxu0 0
        %1890 = vmatpush.bf16.xpose.msra.mxu0 0
        %1891 = vmatpush.bf16.xpose.msra.mxu0 %v1882
        %1892 = vmatmul.bf16.gmra.mxu0 %v1879
        %v1893 = vpop.f32.mrf.mxu0
        %v1894 = vadd.f32 0.0, %v1893
        %v1895 = vpop.f32.mrf.mxu0
        %1896 = vdwg.mxu0
        %v1897 = vsel %vm1503, %v1870, -inf
        %1898 = vmax.xlane.f32.xlu0 %v1897
        %v1899 = vpop.xlane.xlu0 %1898
        %v1900 = vsel %vm1503, %v1894, -inf
        %1901 = vmax.xlane.f32.xlu0 %v1900
        %v1902 = vpop.xlane.xlu0 %1901
        %v1903 = vsub.f32 %v1870, %v1899
        %v1904 = vsub.f32 %v1894, %v1902
        %v1905 = vmul.f32 %v1903, 1.442695
        %v1906 = vpow.pop %v1905
        %v1907 = vmul.f32 %v1904, 1.442695
        %v1908 = vpow.pop %v1907
        %v1909 = vsel %vm1503, %v1906, 0.0
        %1910 = vadd.xlane.f32.xlu0 %v1909
        %v1911 = vpop.xlane.xlu0 %1910
        %v1912 = vsel %vm1503, %v1908, 0.0
        %1913 = vadd.xlane.f32.xlu0 %v1912
        %v1914 = vpop.xlane.xlu0 %1913
        %v1915 = vrcp.pop %v1911
        %v1916 = vrcp.pop %v1914
        %v1917 = vmul.f32 %v1906, %v1915
        %v1918 = vmul.f32 %v1908, %v1916
        %v1919 = vpack.c.bf16 %v1917, %v1917
        %v1920 = vpack.c.bf16 %v1918, %v1918
        %1921 = vrot.lane.b32.xlu0 %v1851, 64
        %v1922 = vpop.permute.xlu0 %1921
        %v1924 = vsel %vm1503, %v1919, 0
        %v1927 = vsel %vm1533, %v1922, 0
        %1929 = vmatpush.bf16.msra.mxu0 0
        %1930 = vmatpush.bf16.msra.mxu0 0
        %1931 = vmatpush.bf16.msra.mxu0 0
        %1932 = vmatpush.bf16.msra.mxu0 0
        %1933 = vmatpush.bf16.msra.mxu0 0
        %1934 = vmatpush.bf16.msra.mxu0 0
        %1935 = vmatpush.bf16.msra.mxu0 0
        %1936 = vmatpush.bf16.msra.mxu0 %v1927
        %1937 = vmatmul.bf16.gmra.mxu0 %v1924
        %v1938 = vpop.f32.mrf.mxu0
        %v1939 = vadd.f32 0.0, %v1938
        %v1940 = vpop.f32.mrf.mxu0
        %1941 = vdwg.mxu0
        %1942 = vrot.lane.b32.xlu0 %v1875, 64
        %v1943 = vpop.permute.xlu0 %1942
        %v1945 = vsel %vm1503, %v1920, 0
        %v1948 = vsel %vm1533, %v1943, 0
        %1950 = vmatpush.bf16.msra.mxu0 0
        %1951 = vmatpush.bf16.msra.mxu0 0
        %1952 = vmatpush.bf16.msra.mxu0 0
        %1953 = vmatpush.bf16.msra.mxu0 0
        %1954 = vmatpush.bf16.msra.mxu0 0
        %1955 = vmatpush.bf16.msra.mxu0 0
        %1956 = vmatpush.bf16.msra.mxu0 0
        %1957 = vmatpush.bf16.msra.mxu0 %v1948
        %1958 = vmatmul.bf16.gmra.mxu0 %v1945
        %v1959 = vpop.f32.mrf.mxu0
        %v1960 = vadd.f32 0.0, %v1959
        %v1961 = vpop.f32.mrf.mxu0
        %1962 = vdwg.mxu0
        %1964 = vrot.lane.b32.xlu0 %v1960, 16
        %v1965 = vpop.permute.xlu0 %1964
        %v1967 = vsel %vm1459, %v1939, %v1965
        %v1968 = vpack.c.bf16 %v1967, %v1967
        %v1970 = vperm.slane %v1784, 0
        %v1976 = vunpack.c.l.b16 %v1780
        %v1977 = vunpack.c.l.b16 %v1781
        %v1978 = vunpack.c.l.b16 %v1782
        %v1979 = vunpack.c.l.b16 %v1783
        %v1980 = vpack.c.b16 %v1977, %v1976
        %v1981 = vpack.c.b16 %v1979, %v1978
        %v1985 = vsel %vm1431, %v1968, 0
        %1987 = vmatpush.bf16.msra.mxu0 0
        %1988 = vmatpush.bf16.msra.mxu0 0
        %1989 = vmatpush.bf16.msra.mxu0 0
        %1990 = vmatpush.bf16.msra.mxu0 0
        %1991 = vmatpush.bf16.msra.mxu0 0
        %1992 = vmatpush.bf16.msra.mxu0 0
        %1993 = vmatpush.bf16.msra.mxu0 %v1981
        %1994 = vmatpush.bf16.msra.mxu0 %v1980
        %1995 = vmatmul.bf16.gmra.mxu0 %v1985
        %v1996 = vpop.f32.mrf.mxu0
        %v1997 = vadd.f32 %v1970, %v1996
        %v1998 = vpop.f32.mrf.mxu0
        %1999 = vdwg.mxu0
        %v2000 = vadd.f32 %v1774, %v1997
        %v2001 = vsel %vm1431, %v2000, 0.0
        %2002 = vadd.xlane.f32.xlu0 %v2001
        %v2003 = vpop.xlane.xlu0 %2002
        %v2004 = vmul.f32 %v2003, %v1618
        %v2005 = vsub.f32 %v2000, %v2004
        %v2006 = vmul.f32 %v2005, %v2005
        %v2007 = vsel %vm1431, %v2006, 0.0
        %2008 = vadd.xlane.f32.xlu0 %v2007
        %v2009 = vpop.xlane.xlu0 %2008
        %v2010 = vmul.f32 %v2009, %v1618
        %v2011 = vadd.f32 %v2010, 1e-05
        %v2012 = vrsqrt.pop %v2011
        %v2013 = vmul.f32 %v2012, %v2011
        %v2014 = vmul.f32 %v2013, %v2012
        %v2015 = vmul.f32 0.5, %v2014
        %v2016 = vsub.f32 1.5, %v2015
        %v2017 = vmul.f32 %v2012, %v2016
        %vm2018 = vweird.f32 %v2011
        %vm2019 = vweird.f32 %v2012
        %vm2020 = vmor %vm2018, %vm2019
        %v2021 = vsel %vm2020, %v2012, %v2017
        %v2022 = vmul.f32 %v2005, %v2021
        %v2024 = vperm.slane %v1785, 0
        %v2026 = vmul.f32 %v2022, %v2024
        %v2028 = vperm.slane %v1786, 0
        %v2030 = vadd.f32 %v2026, %v2028
        %v2031 = vpack.c.bf16 %v2030, %v2030
        %v2033 = vperm.slane %v1791, 0
        %v2039 = vunpack.c.l.b16 %v1787
        %v2040 = vunpack.c.l.b16 %v1788
        %v2041 = vunpack.c.l.b16 %v1789
        %v2042 = vunpack.c.l.b16 %v1790
        %v2043 = vpack.c.b16 %v2040, %v2039
        %v2044 = vpack.c.b16 %v2042, %v2041
        %v2048 = vsel %vm1431, %v2031, 0
        %2050 = vmatpush.bf16.msra.mxu0 0
        %2051 = vmatpush.bf16.msra.mxu0 0
        %2052 = vmatpush.bf16.msra.mxu0 0
        %2053 = vmatpush.bf16.msra.mxu0 0
        %2054 = vmatpush.bf16.msra.mxu0 0
        %2055 = vmatpush.bf16.msra.mxu0 0
        %2056 = vmatpush.bf16.msra.mxu0 %v2044
        %2057 = vmatpush.bf16.msra.mxu0 %v2043
        %2058 = vmatmul.bf16.gmra.mxu0 %v2048
        %v2059 = vpop.f32.mrf.mxu0
        %v2060 = vadd.f32 %v2033, %v2059
        %v2061 = vpop.f32.mrf.mxu0
        %2062 = vdwg.mxu0
        %v2063 = vmax.f32 %v2060, 0.0
        %v2064 = vpack.c.bf16 %v2063, %v2063
        %v2066 = vperm.slane %v1808, 0
        %v2084 = vunpack.c.l.b16 %v1792
        %v2085 = vunpack.c.l.b16 %v1793
        %v2086 = vunpack.c.l.b16 %v1794
        %v2087 = vunpack.c.l.b16 %v1795
        %v2088 = vunpack.c.l.b16 %v1796
        %v2089 = vunpack.c.l.b16 %v1797
        %v2090 = vunpack.c.l.b16 %v1798
        %v2091 = vunpack.c.l.b16 %v1799
        %v2092 = vunpack.c.l.b16 %v1800
        %v2093 = vunpack.c.l.b16 %v1801
        %v2094 = vunpack.c.l.b16 %v1802
        %v2095 = vunpack.c.l.b16 %v1803
        %v2096 = vunpack.c.l.b16 %v1804
        %v2097 = vunpack.c.l.b16 %v1805
        %v2098 = vunpack.c.l.b16 %v1806
        %v2099 = vunpack.c.l.b16 %v1807
        %v2100 = vpack.c.b16 %v2085, %v2084
        %v2101 = vpack.c.b16 %v2087, %v2086
        %v2102 = vpack.c.b16 %v2089, %v2088
        %v2103 = vpack.c.b16 %v2091, %v2090
        %v2104 = vpack.c.b16 %v2093, %v2092
        %v2105 = vpack.c.b16 %v2095, %v2094
        %v2106 = vpack.c.b16 %v2097, %v2096
        %v2107 = vpack.c.b16 %v2099, %v2098
        %2116 = vmatpush.bf16.msra.mxu0 %v2107
        %2117 = vmatpush.bf16.msra.mxu0 %v2106
        %2118 = vmatpush.bf16.msra.mxu0 %v2105
        %2119 = vmatpush.bf16.msra.mxu0 %v2104
        %2120 = vmatpush.bf16.msra.mxu0 %v2103
        %2121 = vmatpush.bf16.msra.mxu0 %v2102
        %2122 = vmatpush.bf16.msra.mxu0 %v2101
        %2123 = vmatpush.bf16.msra.mxu0 %v2100
        %2124 = vmatmul.bf16.gmra.mxu0 %v2064
        %v2125 = vpop.f32.mrf.mxu0
        %v2126 = vadd.f32 %v2066, %v2125
        %v2127 = vpop.f32.mrf.mxu0
        %2128 = vdwg.mxu0
        %v2129 = vadd.f32 %v2030, %v2126
        %v2130 = vsel %vm1431, %v2129, 0.0
        %2131 = vadd.xlane.f32.xlu0 %v2130
        %v2132 = vpop.xlane.xlu0 %2131
        %v2133 = vmul.f32 %v2132, %v1618
        %v2134 = vsub.f32 %v2129, %v2133
        %v2135 = vmul.f32 %v2134, %v2134
        %v2136 = vsel %vm1431, %v2135, 0.0
        %2137 = vadd.xlane.f32.xlu0 %v2136
        %v2138 = vpop.xlane.xlu0 %2137
        %v2139 = vmul.f32 %v2138, %v1618
        %v2140 = vadd.f32 %v2139, 1e-05
        %v2141 = vrsqrt.pop %v2140
        %v2142 = vmul.f32 %v2141, %v2140
        %v2143 = vmul.f32 %v2142, %v2141
        %v2144 = vmul.f32 0.5, %v2143
        %v2145 = vsub.f32 1.5, %v2144
        %v2146 = vmul.f32 %v2141, %v2145
        %vm2147 = vweird.f32 %v2140
        %vm2148 = vweird.f32 %v2141
        %vm2149 = vmor %vm2147, %vm2148
        %v2150 = vsel %vm2149, %v2141, %v2146
        %v2151 = vmul.f32 %v2134, %v2150
        %v2153 = vperm.slane %v1809, 0
        %v2155 = vmul.f32 %v2151, %v2153
        %v2157 = vperm.slane %v1810, 0
        %v2159 = vadd.f32 %v2155, %v2157
        %v2160 = vpack.c.bf16 %v2159, %v2159
        %v2161 = vld [vmem:[%s57] sm:$0xff]
        %v2162 = vld [vmem:[%s57 + $0x8] sm:$0xff]
        %v2163 = vld [vmem:[%s57 + $0x10] sm:$0xf]
        %v2164 = vld [vmem:[%s57 + $0x14] sm:$0xff]
        %v2165 = vld [vmem:[%s57 + $0x1c] sm:$0xff]
        %v2166 = vld [vmem:[%s57 + $0x24] sm:$0xf]
        %v2167 = vld [vmem:[%s57 + $0x28] sm:$0xff]
        %v2168 = vld [vmem:[%s57 + $0x30] sm:$0xff]
        %v2169 = vld [vmem:[%s57 + $0x38] sm:$0xf]
        %v2170 = vld [vmem:[%s57 + $0x3c] sm:$0xff]
        %v2171 = vld [vmem:[%s57 + $0x44] sm:$0xff]
        %v2172 = vld [vmem:[%s57 + $0x4c] sm:$0xf]
        %v2173 = vld [vmem:[%s59] sm:$0x1f]
        %v2175 = vperm.slane %v2173, 0
        %v2176 = vperm.slane %v2173, 1
        %v2177 = vperm.slane %v2173, 2
        %v2178 = vperm.slane %v2173, 3
        %v2179 = vperm.slane %v2173, 4
        %v2197 = vunpack.c.l.b16 %v2161
        %v2198 = vunpack.c.h.b16 %v2161
        %v2199 = vunpack.c.l.b16 %v2162
        %v2200 = vunpack.c.h.b16 %v2162
        %v2201 = vunpack.c.l.b16 %v2163
        %v2202 = vunpack.c.l.b16 %v2164
        %v2203 = vunpack.c.h.b16 %v2164
        %v2204 = vunpack.c.l.b16 %v2165
        %v2205 = vunpack.c.h.b16 %v2165
        %v2206 = vunpack.c.l.b16 %v2166
        %v2207 = vunpack.c.l.b16 %v2167
        %v2208 = vunpack.c.h.b16 %v2167
        %v2209 = vunpack.c.l.b16 %v2168
        %v2210 = vunpack.c.h.b16 %v2168
        %v2211 = vunpack.c.l.b16 %v2169
        %v2212 = vunpack.c.l.b16 %v2170
        %v2213 = vunpack.c.h.b16 %v2170
        %v2214 = vunpack.c.l.b16 %v2171
        %v2215 = vunpack.c.h.b16 %v2171
        %v2216 = vunpack.c.l.b16 %v2172
        %v2217 = vpack.c.b16 %v2202, %v2197
        %v2218 = vpack.c.b16 %v2203, %v2198
        %v2219 = vpack.c.b16 %v2204, %v2199
        %v2220 = vpack.c.b16 %v2205, %v2200
        %v2221 = vpack.c.b16 %v2206, %v2201
        %v2222 = vpack.c.b16 %v2212, %v2207
        %v2223 = vpack.c.b16 %v2213, %v2208
        %v2224 = vpack.c.b16 %v2214, %v2209
        %v2225 = vpack.c.b16 %v2215, %v2210
        %v2226 = vpack.c.b16 %v2216, %v2211
        %v2238 = vsel %vm1431, %v2160, 0
        %2240 = vmatpush.bf16.msra.mxu0 0
        %2241 = vmatpush.bf16.msra.mxu0 0
        %2242 = vmatpush.bf16.msra.mxu0 0
        %2243 = vmatpush.bf16.msra.mxu0 0
        %2244 = vmatpush.bf16.msra.mxu0 0
        %2245 = vmatpush.bf16.msra.mxu0 0
        %2246 = vmatpush.bf16.msra.mxu0 %v2222
        %2247 = vmatpush.bf16.msra.mxu0 %v2217
        %2248 = vmatmul.bf16.gmra.mxu0 %v2238
        %v2249 = vpop.f32.mrf.mxu0
        %v2250 = vadd.f32 %v2175, %v2249
        %v2251 = vpop.f32.mrf.mxu0
        %2252 = vdwg.mxu0
        %2253 = vmatpush.bf16.msra.mxu0 0
        %2254 = vmatpush.bf16.msra.mxu0 0
        %2255 = vmatpush.bf16.msra.mxu0 0
        %2256 = vmatpush.bf16.msra.mxu0 0
        %2257 = vmatpush.bf16.msra.mxu0 0
        %2258 = vmatpush.bf16.msra.mxu0 0
        %2259 = vmatpush.bf16.msra.mxu0 %v2223
        %2260 = vmatpush.bf16.msra.mxu0 %v2218
        %2261 = vmatmul.bf16.gmra.mxu0 %v2238
        %v2262 = vpop.f32.mrf.mxu0
        %v2263 = vadd.f32 %v2176, %v2262
        %v2264 = vpop.f32.mrf.mxu0
        %2265 = vdwg.mxu0
        %2266 = vmatpush.bf16.msra.mxu0 0
        %2267 = vmatpush.bf16.msra.mxu0 0
        %2268 = vmatpush.bf16.msra.mxu0 0
        %2269 = vmatpush.bf16.msra.mxu0 0
        %2270 = vmatpush.bf16.msra.mxu0 0
        %2271 = vmatpush.bf16.msra.mxu0 0
        %2272 = vmatpush.bf16.msra.mxu0 %v2224
        %2273 = vmatpush.bf16.msra.mxu0 %v2219
        %2274 = vmatmul.bf16.gmra.mxu0 %v2238
        %v2275 = vpop.f32.mrf.mxu0
        %v2276 = vadd.f32 %v2177, %v2275
        %v2277 = vpop.f32.mrf.mxu0
        %2278 = vdwg.mxu0
        %2279 = vmatpush.bf16.msra.mxu0 0
        %2280 = vmatpush.bf16.msra.mxu0 0
        %2281 = vmatpush.bf16.msra.mxu0 0
        %2282 = vmatpush.bf16.msra.mxu0 0
        %2283 = vmatpush.bf16.msra.mxu0 0
        %2284 = vmatpush.bf16.msra.mxu0 0
        %2285 = vmatpush.bf16.msra.mxu0 %v2225
        %2286 = vmatpush.bf16.msra.mxu0 %v2220
        %2287 = vmatmul.bf16.gmra.mxu0 %v2238
        %v2288 = vpop.f32.mrf.mxu0
        %v2289 = vadd.f32 %v2178, %v2288
        %v2290 = vpop.f32.mrf.mxu0
        %2291 = vdwg.mxu0
        %2292 = vmatpush.bf16.msra.mxu0 0
        %2293 = vmatpush.bf16.msra.mxu0 0
        %2294 = vmatpush.bf16.msra.mxu0 0
        %2295 = vmatpush.bf16.msra.mxu0 0
        %2296 = vmatpush.bf16.msra.mxu0 0
        %2297 = vmatpush.bf16.msra.mxu0 0
        %2298 = vmatpush.bf16.msra.mxu0 %v2226
        %2299 = vmatpush.bf16.msra.mxu0 %v2221
        %2300 = vmatmul.bf16.gmra.mxu0 %v2238
        %v2301 = vpop.f32.mrf.mxu0
        %v2302 = vadd.f32 %v2179, %v2301
        %v2303 = vpop.f32.mrf.mxu0
        %2304 = vdwg.mxu0
        %v2305 = vld [vmem:[%s976] sm:$0xff]
        %v2306 = vld [vmem:[%s976 + $0x8] sm:$0xff]
        %v2307 = vld [vmem:[%s976 + $0x10] sm:$0xff]
        %v2308 = vld [vmem:[%s976 + $0x18] sm:$0xff]
        %v2309 = vld [vmem:[%s976 + $0x20] sm:$0xff]
        %v2310 = vadd.f32 %v2250, %v2305
        %v2311 = vadd.f32 %v2263, %v2306
        %v2312 = vadd.f32 %v2276, %v2307
        %v2313 = vadd.f32 %v2289, %v2308
        %v2314 = vadd.f32 %v2302, %v2309
        %v2315 = vmax.f32 %v2310, %v2314
        %v2316 = vmax.f32 %v2315, %v2311
        %v2317 = vmax.f32 %v2312, %v2313
        %v2318 = vmax.f32 %v2316, %v2317
        %2319 = vmax.xlane.f32.xlu0 %v2318
        %v2320 = vpop.xlane.xlu0 %2319
        %v2321 = vlaneseq
        %v2322 = vand.u32 %v2321, 127
        %v2323 = vadd.s32 %v2322, 128
        %v2324 = vadd.s32 %v2322, 256
        %v2325 = vadd.s32 %v2322, 384
        %v2326 = vadd.s32 %v2322, 512
        %vm2327 = vcmp.eq.f32.partialorder %v2310, %v2320
        %vm2328 = vcmp.eq.f32.partialorder %v2311, %v2320
        %vm2329 = vcmp.eq.f32.partialorder %v2312, %v2320
        %vm2330 = vcmp.eq.f32.partialorder %v2313, %v2320
        %vm2331 = vcmp.eq.f32.partialorder %v2314, %v2320
        %v2332 = vsel %vm2327, %v2322, 640
        %v2333 = vsel %vm2328, %v2323, 640
        %v2334 = vsel %vm2329, %v2324, 640
        %v2335 = vsel %vm2330, %v2325, 640
        %v2336 = vsel %vm2331, %v2326, 640
        %vm2337 = vcmp.lt.s32.totalorder %v2332, %v2336
        %v2338 = vsel %vm2337, %v2332, %v2336
        %vm2339 = vcmp.lt.s32.totalorder %v2338, %v2333
        %v2340 = vsel %vm2339, %v2338, %v2333
        %vm2341 = vcmp.lt.s32.totalorder %v2334, %v2335
        %v2342 = vsel %vm2341, %v2334, %v2335
        %vm2343 = vcmp.lt.s32.totalorder %v2340, %v2342
        %v2344 = vsel %vm2343, %v2340, %v2342
        %v2345 = vand.u32 %v2344, 65535
        %v2346 = vshra.s32 %v2344, 16
        %v2347 = vcvt.s32.f32 %v2345
        %v2348 = vcvt.s32.f32 %v2346
        %2349 = vmin.xlane.f32.xlu0 %v2348
        %v2350 = vpop.xlane.xlu0 %2349
        %vm2351 = vcmp.eq.f32.partialorder %v2348, %v2350
        %v2352 = vsel %vm2351, %v2347, inf
        %2353 = vmin.xlane.f32.xlu0 %v2352
        %v2354 = vpop.xlane.xlu0 %2353
        %v2355 = vcvt.f32.s32 %v2354
        %v2356 = vcvt.f32.s32 %v2350
        %v2357 = vshll.u32 %v2356, 16
        %v2358 = vadd.s32 %v2357, %v2355
        %vm2359 = vcmp.eq.s32.totalorder %v2322, %v2358
        %vm2360 = vcmp.eq.s32.totalorder %v2323, %v2358
        %vm2361 = vcmp.eq.s32.totalorder %v2324, %v2358
        %vm2362 = vcmp.eq.s32.totalorder %v2325, %v2358
        %vm2363 = vcmp.eq.s32.totalorder %v2326, %v2358
        %v2364 = vsel %vm2359, 1, 0
        %v2365 = vsel %vm2360, 1, 0
        %v2366 = vsel %vm2361, 1, 0
        %v2367 = vsel %vm2362, 1, 0
        %v2368 = vsel %vm2363, 1, 0
        %v2369 = vcvt.s32.f32 %v2364
        %v2370 = vcvt.s32.f32 %v2365
        %v2371 = vcvt.s32.f32 %v2366
        %v2372 = vcvt.s32.f32 %v2367
        %v2373 = vcvt.s32.f32 %v2368
        %2374 = vst [vmem:[%s966] sm:$0xff] %v2369
        %2375 = vst [vmem:[%s966 + $0x8] sm:$0xff] %v2370
        %2376 = vst [vmem:[%s966 + $0x10] sm:$0xff] %v2371
        %2377 = vst [vmem:[%s966 + $0x18] sm:$0xff] %v2372
        %2378 = vst [vmem:[%s966 + $0x20] sm:$0xff] %v2373
        %s2379 = sand.u32 %s746, 1
        %s2380 = scalar_lea.sflag [#allocation3], %s2379
        %s2381 = sand.u32 %s746, 1
        %s2382 = smul.addr %s2381, 40
        %s2383 = scalar_lea.vmem [#allocation2], %s2382
        // Predicated region
        $region145: #{tpu_custom_call.1} parent=143 // pred_check
          %p2384 = pneg %p756
        $region146: #{tpu_custom_call.1} parent=143 // pred_check_branch
          %2386 = sbr.rel (%p2384) target = $region148
        $region147: #{tpu_custom_call.1} parent=143 // pred_region
          %2388 = vsyncadd %s2380, 0
          %s2389 = smul.addr %s77, 5
          %s2390 = smul.addr %s2389, 8
          %s2391 = scalar_lea.hbm %s63, %s2390
          %s2393 = sshll.u32 %s2383, 4
          %s2394 = int_to_ptr.vmem [resolvable:$true] %s2393
          %s2395 = sshll.u32 %s2391, 4
          %s2396 = int_to_ptr.hbm [resolvable:$true] %s2395
          %2398 = dma.vmem_to_hbm [thread:$0]  %s2394, 640, %s2396, %s2380
        $region148: #{tpu_custom_call.1} parent=143 // pred_fallthru
          _
      $region144: #{tpu_custom_call.1} parent=5 // pred_fallthru
        _
      %p2399 = scmp.le.s32.totalorder 2, %s72
      // Predicated region
      $region149: #{tpu_custom_call.1} parent=5 // pred_check
        %p2400 = pneg %p2399
      $region150: #{tpu_custom_call.1} parent=5 // pred_check_branch
        %2402 = sbr.rel (%p2400) target = $region152
      $region151: #{tpu_custom_call.1} parent=5 // pred_region
        %s2403 = ssub.s32 %s72, 2
        // Predicated region
        $region153: #{tpu_custom_call.1} parent=151 // pred_check
          %p2404 = pneg %p762
        $region154: #{tpu_custom_call.1} parent=151 // pred_check_branch
          %2406 = sbr.rel (%p2404) target = $region156
        $region155: #{tpu_custom_call.1} parent=151 // pred_region
          %s2407 = sand.u32 %s747, 1
          %s2408 = scalar_lea.sflag [#allocation3], %s2407
          %s2409 = sand.u32 %s747, 1
          %s2410 = smul.addr %s2409, 40
          %s2411 = scalar_lea.vmem [#allocation2], %s2410
          %2413 = dma.done %s2408, 640
        $region156: #{tpu_custom_call.1} parent=151 // pred_fallthru
          _
      $region152: #{tpu_custom_call.1} parent=5 // pred_fallthru
        _
    $region6: #{tpu_custom_call.1} parent=1 // loop_footer
      %s76 = sadd.s32 1, %s72
    $region7: #{tpu_custom_call.1} parent=1 // loop_footer_branch
      %71 = sbr.rel target = $region3
    $region8: #{tpu_custom_call.1} parent=1 // loop_exit
      _
    %2414 = vsyncpa [#allocation3], 1
    %s2415 = scalar_lea.sflag [#allocation3], 1
    %2416 = vsyncpa %s2415, 1

</llo_original>
